<compile_context>
chip_gen: v7x
topology: tpu7x:2x2x1
jax: 0.10.0
libtpu: 0.0.40
codegen_flags: <defaults>
</compile_context>

<pallas_src>
import functools
import math

import jax
import jax.numpy as jnp
from jax import lax
from jax.experimental import pallas as pl
from jax.experimental.pallas import tpu as pltpu

LN_EPS = 1e-5


def _layernorm_nogain(x):
    # Pure normalisation; gamma/beta are folded into the next matmul.
    mu = jnp.mean(x, axis=-1, keepdims=True)
    xc = x - mu
    var = jnp.mean(xc * xc, axis=-1, keepdims=True)
    return xc * lax.rsqrt(var + LN_EPS)


def _gelu_tanh(x):
    # GELU(approximate='tanh'): 0.5*x*(1+tanh(sqrt(2/pi)*(x+0.044715*x^3)))
    c = 0.7978845608028654  # sqrt(2/pi)
    return 0.5 * x * (1.0 + jnp.tanh(c * (x + 0.044715 * x * x * x)))


def _block_kernel(
    x_ref,
    wattn_ref, battn_ref,
    wproj_ref, bproj_ref,
    wfc_ref, bfc_ref,
    wproj2_ref, bproj2_ref,
    out_ref,
    *,
    n_head: int,
):
    x = x_ref[...]                               # (T, C) f32 (batch dim squeezed)
    T, C = x.shape
    hd = C // n_head

    # ---- x + attn(ln_1(x)) -------------------------------------------------
    h = _layernorm_nogain(x)                                                  # f32
    # gamma/beta of ln_1 and the 1/sqrt(hd) q-scale are pre-folded into
    # wattn/battn; bf16 operands, f32 accumulation.
    qkv = jnp.dot(h.astype(jnp.bfloat16), wattn_ref[...],
                  preferred_element_type=jnp.float32) + battn_ref[...]        # (T,3C)

    q = qkv[:, 0 * C:1 * C]
    k = qkv[:, 1 * C:2 * C]
    v = qkv[:, 2 * C:3 * C]

    def split_heads(z):                          # (T, C) -> (n_head, T, hd)
        return jnp.stack(
            [z[:, i * hd:(i + 1) * hd] for i in range(n_head)], axis=0)

    qh = split_heads(q).astype(jnp.bfloat16)
    kh = split_heads(k).astype(jnp.bfloat16)
    vh = split_heads(v).astype(jnp.bfloat16)

    # single batched score matmul over all heads (MXU, f32 accumulation)
    s = jnp.einsum("htd,hsd->hts", qh, kh,
                   preferred_element_type=jnp.float32)                        # (H,T,T)

    rows = lax.broadcasted_iota(jnp.int32, (T, T), 0)
    cols = lax.broadcasted_iota(jnp.int32, (T, T), 1)
    causal = rows >= cols
    s = jnp.where(causal[None, :, :], s, -1e30)

    # softmax in f32; the divide goes to the EUP via approx reciprocal
    s = s - jnp.max(s, axis=-1, keepdims=True)
    e = jnp.exp(s)
    p = e * pl.reciprocal(jnp.sum(e, axis=-1, keepdims=True), approx=True)

    yh = jnp.einsum("hts,hsd->htd", p.astype(jnp.bfloat16), vh,
                    preferred_element_type=jnp.float32)                       # (H,T,hd)
    y = jnp.concatenate([yh[i] for i in range(n_head)], axis=-1)              # (T, C)

    # single full-width output projection + one bias add
    attn_out = jnp.dot(y.astype(jnp.bfloat16), wproj_ref[...],
                       preferred_element_type=jnp.float32) + bproj_ref[...]
    x1 = x + attn_out

    # ---- x + mlp(ln_2(x)) --------------------------------------------------
    h2 = _layernorm_nogain(x1)
    # ln_2 gamma/beta pre-folded into wfc/bfc.
    fc = jnp.dot(h2.astype(jnp.bfloat16), wfc_ref[...],
                 preferred_element_type=jnp.float32) + bfc_ref[...]           # (T,4C)
    g = _gelu_tanh(fc)
    mlp_out = jnp.dot(g.astype(jnp.bfloat16), wproj2_ref[...],
                      preferred_element_type=jnp.float32) + bproj2_ref[...]

    out_ref[...] = x1 + mlp_out


def gpt2_block(x, params, n_head):
    """x: (B, T, C) float32.  params: dict of pre-transposed (in, out) weights."""
    B, T, C = x.shape
    hd = C // n_head
    scale = 1.0 / math.sqrt(hd)

    # --- fold LN affines + q-scale into the downstream matmuls (exact, f32) ---
    g1 = params["ln1_w"].reshape(C, 1)                        # scales input rows
    w_attn = params["w_attn"] * g1
    b_attn = params["b_attn"] + params["ln1_b"] @ params["w_attn"]
    col_scale = jnp.concatenate(
        [jnp.full((1, C), scale, jnp.float32), jnp.ones((1, 2 * C), jnp.float32)],
        axis=1)                                               # scale only q columns
    w_attn = w_attn * col_scale
    b_attn = b_attn * col_scale

    g2 = params["ln2_w"].reshape(C, 1)
    w_fc = params["w_fc"] * g2
    b_fc = params["b_fc"] + params["ln2_b"] @ params["w_fc"]

    # Matmul weights fed to the MXU as bf16; biases stay f32.
    plist = [
        w_attn.astype(jnp.bfloat16), b_attn,
        params["w_proj"].astype(jnp.bfloat16), params["b_proj"],
        w_fc.astype(jnp.bfloat16), b_fc,
        params["w_proj2"].astype(jnp.bfloat16), params["b_proj2"],
    ]

    def const_spec(shape):
        zeros = (0,) * len(shape)
        return pl.BlockSpec(shape, lambda b, _z=zeros: _z)

    in_specs = [pl.BlockSpec((pl.Squeezed(), T, C), lambda b: (b, 0, 0))]
    in_specs += [const_spec(p.shape) for p in plist]

    return pl.pallas_call(
        functools.partial(_block_kernel, n_head=n_head),
        out_shape=jax.ShapeDtypeStruct((B, T, C), jnp.float32),
        grid_spec=pltpu.PrefetchScalarGridSpec(
            num_scalar_prefetch=0,
            grid=(B,),
            in_specs=in_specs,
            out_specs=pl.BlockSpec((pl.Squeezed(), T, C), lambda b: (b, 0, 0)),
        ),
        compiler_params=pltpu.CompilerParams(
            dimension_semantics=("parallel",),
            vmem_limit_bytes=64 * 1024 * 1024,
        ),
    )(x, *plist)


# ---------------------------- pure-JAX reference -----------------------------
def ref_block(x, params, n_head):
    B, T, C = x.shape
    hd = C // n_head

    def ln(z, w, b):
        mu = jnp.mean(z, axis=-1, keepdims=True)
        var = jnp.mean((z - mu) ** 2, axis=-1, keepdims=True)
        return (z - mu) / jnp.sqrt(var + LN_EPS) * w + b

    h = ln(x, params["ln1_w"], params["ln1_b"])
    qkv = h @ params["w_attn"] + params["b_attn"]
    q, k, v = jnp.split(qkv, 3, axis=-1)
    q = q.reshape(B, T, n_head, hd).transpose(0, 2, 1, 3)
    k = k.reshape(B, T, n_head, hd).transpose(0, 2, 1, 3)
    v = v.reshape(B, T, n_head, hd).transpose(0, 2, 1, 3)
    s = jnp.einsum("bhtd,bhsd->bhts", q, k) / math.sqrt(hd)
    mask = jnp.tril(jnp.ones((T, T), dtype=bool))
    s = jnp.where(mask, s, -1e30)
    p = jax.nn.softmax(s, axis=-1)
    y = jnp.einsum("bhts,bhsd->bhtd", p, v).transpose(0, 2, 1, 3).reshape(B, T, C)
    x1 = x + y @ params["w_proj"] + params["b_proj"]

    h2 = ln(x1, params["ln2_w"], params["ln2_b"])
    g = _gelu_tanh(h2 @ params["w_fc"] + params["b_fc"])
    return x1 + g @ params["w_proj2"] + params["b_proj2"]


if __name__ == "__main__":
    # Small config consistent with the module: n_embd=32, n_head=4, seq=8, batch=2
    B, T, C, NH = 2, 8, 32, 4

    key = jax.random.PRNGKey(0)
    ks = jax.random.split(key, 12)

    def w(k, shape, std=0.02):
        return (std * jax.random.normal(k, shape)).astype(jnp.float32)

    params = {
        # non-trivial LN params so the weight-folding path is actually exercised
        "ln1_w": (1.0 + 0.1 * jax.random.normal(ks[8], (1, C))).astype(jnp.float32),
        "ln1_b": (0.05 * jax.random.normal(ks[9], (1, C))).astype(jnp.float32),
        "w_attn": w(ks[0], (C, 3 * C)),            # c_attn, pre-transposed (in, out)
        "b_attn": w(ks[1], (1, 3 * C)),
        "w_proj": w(ks[2], (C, C)),                # attn c_proj
        "b_proj": w(ks[3], (1, C)),
        "ln2_w": (1.0 + 0.1 * jax.random.normal(ks[10], (1, C))).astype(jnp.float32),
        "ln2_b": (0.05 * jax.random.normal(ks[11], (1, C))).astype(jnp.float32),
        "w_fc": w(ks[4], (C, 4 * C)),              # mlp c_fc
        "b_fc": w(ks[5], (1, 4 * C)),
        "w_proj2": w(ks[6], (4 * C, C)),           # mlp c_proj
        "b_proj2": w(ks[7], (1, C)),
    }

    x = jax.random.normal(jax.random.PRNGKey(42), (B, T, C), dtype=jnp.float32)

    out = gpt2_block(x, params, NH)
    out = jax.block_until_ready(out)

    expected = ref_block(x, params, NH)
    assert out.shape == (B, T, C)
    # bf16 matmul operands + approx reciprocal introduce small drift vs the
    # pure-f32 reference; accumulation / LN / softmax / GELU remain f32.
    assert jnp.allclose(out, expected, atol=5e-3, rtol=5e-3), (
        float(jnp.max(jnp.abs(out - expected))))

    print("KERNEL_OK")
</pallas_src>

<mosaic_0001>
module attributes {stable_mosaic.version = 11 : i64} {
  func.func @_block_kernel(%arg0: i32, %arg1: memref<1x8x32xf32, #tpu.memory_space<vmem>>, %arg2: memref<32x96xbf16, #tpu.memory_space<vmem>>, %arg3: memref<1x96xf32, #tpu.memory_space<vmem>>, %arg4: memref<32x32xbf16, #tpu.memory_space<vmem>>, %arg5: memref<1x32xf32, #tpu.memory_space<vmem>>, %arg6: memref<32x128xbf16, #tpu.memory_space<vmem>>, %arg7: memref<1x128xf32, #tpu.memory_space<vmem>>, %arg8: memref<128x32xbf16, #tpu.memory_space<vmem>>, %arg9: memref<1x32xf32, #tpu.memory_space<vmem>>, %arg10: memref<1x8x32xf32, #tpu.memory_space<vmem>>) attributes {dimension_semantics = [#tpu.dimension_semantics<parallel>], iteration_bounds = array<i64: 2>, scalar_prefetch = 0 : i64, scratch_operands = 0 : i64, tpu.core_type = #tpu.core_type<tc>, window_params = [{transform_indices = @transform_0, window_bounds = array<i64: 1, 8, 32>}, {pipeline_mode = #tpu.pipeline_mode<synchronous>, transform_indices = @transform_1, window_bounds = array<i64: 32, 96>}, {pipeline_mode = #tpu.pipeline_mode<synchronous>, transform_indices = @transform_2, window_bounds = array<i64: 1, 96>}, {pipeline_mode = #tpu.pipeline_mode<synchronous>, transform_indices = @transform_3, window_bounds = array<i64: 32, 32>}, {pipeline_mode = #tpu.pipeline_mode<synchronous>, transform_indices = @transform_4, window_bounds = array<i64: 1, 32>}, {pipeline_mode = #tpu.pipeline_mode<synchronous>, transform_indices = @transform_5, window_bounds = array<i64: 32, 128>}, {pipeline_mode = #tpu.pipeline_mode<synchronous>, transform_indices = @transform_6, window_bounds = array<i64: 1, 128>}, {pipeline_mode = #tpu.pipeline_mode<synchronous>, transform_indices = @transform_7, window_bounds = array<i64: 128, 32>}, {pipeline_mode = #tpu.pipeline_mode<synchronous>, transform_indices = @transform_8, window_bounds = array<i64: 1, 32>}, {transform_indices = @transform_9, window_bounds = array<i64: 1, 8, 32>}]} {
    %c0 = arith.constant 0 : index
    %c0_0 = arith.constant 0 : index
    %c0_1 = arith.constant 0 : index
    %0 = vector.load %arg1[%c0, %c0_0, %c0_1] : memref<1x8x32xf32, #tpu.memory_space<vmem>>, vector<1x8x32xf32>
    %1 = vector.shape_cast %0 : vector<1x8x32xf32> to vector<8x32xf32>
    %cst = arith.constant dense<0.000000e+00> : vector<8xf32>
    %2 = vector.multi_reduction <add>, %1, %cst [1] : vector<8x32xf32> to vector<8xf32>
    %3 = vector.shape_cast %2 : vector<8xf32> to vector<8x1xf32>
    %cst_2 = arith.constant 3.200000e+01 : f32
    %4 = vector.broadcast %cst_2 : f32 to vector<8x1xf32>
    %5 = arith.divf %3, %4 : vector<8x1xf32>
    %6 = vector.broadcast %5 : vector<8x1xf32> to vector<8x32xf32>
    %7 = arith.subf %1, %6 : vector<8x32xf32>
    %8 = arith.mulf %7, %7 : vector<8x32xf32>
    %cst_3 = arith.constant dense<0.000000e+00> : vector<8xf32>
    %9 = vector.multi_reduction <add>, %8, %cst_3 [1] : vector<8x32xf32> to vector<8xf32>
    %10 = vector.shape_cast %9 : vector<8xf32> to vector<8x1xf32>
    %cst_4 = arith.constant 3.200000e+01 : f32
    %11 = vector.broadcast %cst_4 : f32 to vector<8x1xf32>
    %12 = arith.divf %10, %11 : vector<8x1xf32>
    %cst_5 = arith.constant 9.99999974E-6 : f32
    %13 = vector.broadcast %cst_5 : f32 to vector<8x1xf32>
    %14 = arith.addf %12, %13 : vector<8x1xf32>
    %15 = math.rsqrt %14 : vector<8x1xf32>
    %16 = vector.broadcast %15 : vector<8x1xf32> to vector<8x32xf32>
    %17 = arith.mulf %7, %16 : vector<8x32xf32>
    %18 = arith.truncf %17 : vector<8x32xf32> to vector<8x32xbf16>
    %c0_6 = arith.constant 0 : index
    %c0_7 = arith.constant 0 : index
    %19 = vector.load %arg2[%c0_6, %c0_7] : memref<32x96xbf16, #tpu.memory_space<vmem>>, vector<32x96xbf16>
    %cst_8 = arith.constant dense<0.000000e+00> : vector<8x96xf32>
    %20 = tpu.matmul %18, %19, %cst_8 {dimension_numbers = #tpu.dot_dimension_numbers<[1], [0], [0], [1], [0, 0, 1, 1], [], []>} : vector<8x32xbf16>, vector<32x96xbf16>, vector<8x96xf32> -> vector<8x96xf32>
    %c0_9 = arith.constant 0 : index
    %c0_10 = arith.constant 0 : index
    %21 = vector.load %arg3[%c0_9, %c0_10] : memref<1x96xf32, #tpu.memory_space<vmem>>, vector<1x96xf32>
    %22 = vector.broadcast %21 : vector<1x96xf32> to vector<8x96xf32>
    %23 = arith.addf %20, %22 : vector<8x96xf32>
    %24 = vector.extract_strided_slice %23 {offsets = [0, 0], sizes = [8, 32], strides = [1, 1]} : vector<8x96xf32> to vector<8x32xf32>
    %25 = vector.extract_strided_slice %23 {offsets = [0, 32], sizes = [8, 32], strides = [1, 1]} : vector<8x96xf32> to vector<8x32xf32>
    %26 = vector.extract_strided_slice %23 {offsets = [0, 64], sizes = [8, 32], strides = [1, 1]} : vector<8x96xf32> to vector<8x32xf32>
    %27 = vector.extract_strided_slice %24 {offsets = [0, 0], sizes = [8, 8], strides = [1, 1]} : vector<8x32xf32> to vector<8x8xf32>
    %28 = vector.extract_strided_slice %24 {offsets = [0, 8], sizes = [8, 8], strides = [1, 1]} : vector<8x32xf32> to vector<8x8xf32>
    %29 = vector.extract_strided_slice %24 {offsets = [0, 16], sizes = [8, 8], strides = [1, 1]} : vector<8x32xf32> to vector<8x8xf32>
    %30 = vector.extract_strided_slice %24 {offsets = [0, 24], sizes = [8, 8], strides = [1, 1]} : vector<8x32xf32> to vector<8x8xf32>
    %31 = vector.shape_cast %27 : vector<8x8xf32> to vector<1x8x8xf32>
    %32 = vector.shape_cast %28 : vector<8x8xf32> to vector<1x8x8xf32>
    %33 = vector.shape_cast %29 : vector<8x8xf32> to vector<1x8x8xf32>
    %34 = vector.shape_cast %30 : vector<8x8xf32> to vector<1x8x8xf32>
    %35 = tpu.concatenate %31, %32, %33, %34 in 0 : vector<1x8x8xf32>, vector<1x8x8xf32>, vector<1x8x8xf32>, vector<1x8x8xf32> -> vector<4x8x8xf32>
    %36 = arith.truncf %35 : vector<4x8x8xf32> to vector<4x8x8xbf16>
    %37 = vector.extract_strided_slice %25 {offsets = [0, 0], sizes = [8, 8], strides = [1, 1]} : vector<8x32xf32> to vector<8x8xf32>
    %38 = vector.extract_strided_slice %25 {offsets = [0, 8], sizes = [8, 8], strides = [1, 1]} : vector<8x32xf32> to vector<8x8xf32>
    %39 = vector.extract_strided_slice %25 {offsets = [0, 16], sizes = [8, 8], strides = [1, 1]} : vector<8x32xf32> to vector<8x8xf32>
    %40 = vector.extract_strided_slice %25 {offsets = [0, 24], sizes = [8, 8], strides = [1, 1]} : vector<8x32xf32> to vector<8x8xf32>
    %41 = vector.shape_cast %37 : vector<8x8xf32> to vector<1x8x8xf32>
    %42 = vector.shape_cast %38 : vector<8x8xf32> to vector<1x8x8xf32>
    %43 = vector.shape_cast %39 : vector<8x8xf32> to vector<1x8x8xf32>
    %44 = vector.shape_cast %40 : vector<8x8xf32> to vector<1x8x8xf32>
    %45 = tpu.concatenate %41, %42, %43, %44 in 0 : vector<1x8x8xf32>, vector<1x8x8xf32>, vector<1x8x8xf32>, vector<1x8x8xf32> -> vector<4x8x8xf32>
    %46 = arith.truncf %45 : vector<4x8x8xf32> to vector<4x8x8xbf16>
    %47 = vector.extract_strided_slice %26 {offsets = [0, 0], sizes = [8, 8], strides = [1, 1]} : vector<8x32xf32> to vector<8x8xf32>
    %48 = vector.extract_strided_slice %26 {offsets = [0, 8], sizes = [8, 8], strides = [1, 1]} : vector<8x32xf32> to vector<8x8xf32>
    %49 = vector.extract_strided_slice %26 {offsets = [0, 16], sizes = [8, 8], strides = [1, 1]} : vector<8x32xf32> to vector<8x8xf32>
    %50 = vector.extract_strided_slice %26 {offsets = [0, 24], sizes = [8, 8], strides = [1, 1]} : vector<8x32xf32> to vector<8x8xf32>
    %51 = vector.shape_cast %47 : vector<8x8xf32> to vector<1x8x8xf32>
    %52 = vector.shape_cast %48 : vector<8x8xf32> to vector<1x8x8xf32>
    %53 = vector.shape_cast %49 : vector<8x8xf32> to vector<1x8x8xf32>
    %54 = vector.shape_cast %50 : vector<8x8xf32> to vector<1x8x8xf32>
    %55 = tpu.concatenate %51, %52, %53, %54 in 0 : vector<1x8x8xf32>, vector<1x8x8xf32>, vector<1x8x8xf32>, vector<1x8x8xf32> -> vector<4x8x8xf32>
    %56 = arith.truncf %55 : vector<4x8x8xf32> to vector<4x8x8xbf16>
    "tpu.trace_start"() <{level = 10 : i32, message = "htd,hsd->hts"}> : () -> ()
    %cst_11 = arith.constant dense<0.000000e+00> : vector<4x8x8xf32>
    %57 = tpu.matmul %36, %46, %cst_11 {dimension_numbers = #tpu.dot_dimension_numbers<[2], [2], [1], [1], [0, 0, 0, 1, 1, 1], [0], [0]>} : vector<4x8x8xbf16>, vector<4x8x8xbf16>, vector<4x8x8xf32> -> vector<4x8x8xf32>
    "tpu.trace_stop"() : () -> ()
    %58 = tpu.iota {dimensions = array<i32: 0>} : vector<8x8xi32>
    %59 = tpu.iota {dimensions = array<i32: 1>} : vector<8x8xi32>
    %60 = arith.cmpi sge, %58, %59 : vector<8x8xi32>
    %61 = vector.shape_cast %60 : vector<8x8xi1> to vector<1x8x8xi1>
    %cst_12 = arith.constant -1.000000e+30 : f32
    %62 = vector.shape_cast %61 : vector<1x8x8xi1> to vector<1x8x8xi1>
    %63 = vector.broadcast %62 : vector<1x8x8xi1> to vector<4x8x8xi1>
    %64 = vector.broadcast %cst_12 : f32 to vector<4x8x8xf32>
    %65 = arith.select %63, %57, %64 : vector<4x8x8xi1>, vector<4x8x8xf32>
    %cst_13 = arith.constant dense<0xFF800000> : vector<4x8xf32>
    %66 = vector.multi_reduction <maximumf>, %65, %cst_13 [2] : vector<4x8x8xf32> to vector<4x8xf32>
    %67 = vector.shape_cast %66 : vector<4x8xf32> to vector<4x8x1xf32>
    %68 = vector.broadcast %67 : vector<4x8x1xf32> to vector<4x8x8xf32>
    %69 = arith.subf %65, %68 : vector<4x8x8xf32>
    %70 = math.exp %69 : vector<4x8x8xf32>
    %cst_14 = arith.constant dense<0.000000e+00> : vector<4x8xf32>
    %71 = vector.multi_reduction <add>, %70, %cst_14 [2] : vector<4x8x8xf32> to vector<4x8xf32>
    %72 = vector.shape_cast %71 : vector<4x8xf32> to vector<4x8x1xf32>
    %73 = tpu.reciprocal %72 {approx = true} : vector<4x8x1xf32> -> vector<4x8x1xf32>
    %74 = vector.broadcast %73 : vector<4x8x1xf32> to vector<4x8x8xf32>
    %75 = arith.mulf %70, %74 : vector<4x8x8xf32>
    %76 = arith.truncf %75 : vector<4x8x8xf32> to vector<4x8x8xbf16>
    "tpu.trace_start"() <{level = 10 : i32, message = "hts,hsd->htd"}> : () -> ()
    %cst_15 = arith.constant dense<0.000000e+00> : vector<4x8x8xf32>
    %77 = tpu.matmul %76, %56, %cst_15 {dimension_numbers = #tpu.dot_dimension_numbers<[2], [1], [1], [2], [0, 0, 0, 1, 1, 2], [0], [0]>} : vector<4x8x8xbf16>, vector<4x8x8xbf16>, vector<4x8x8xf32> -> vector<4x8x8xf32>
    "tpu.trace_stop"() : () -> ()
    %78 = vector.extract_strided_slice %77 {offsets = [0, 0, 0], sizes = [1, 8, 8], strides = [1, 1, 1]} : vector<4x8x8xf32> to vector<1x8x8xf32>
    %79 = vector.shape_cast %78 : vector<1x8x8xf32> to vector<8x8xf32>
    %80 = vector.extract_strided_slice %77 {offsets = [1, 0, 0], sizes = [1, 8, 8], strides = [1, 1, 1]} : vector<4x8x8xf32> to vector<1x8x8xf32>
    %81 = vector.shape_cast %80 : vector<1x8x8xf32> to vector<8x8xf32>
    %82 = vector.extract_strided_slice %77 {offsets = [2, 0, 0], sizes = [1, 8, 8], strides = [1, 1, 1]} : vector<4x8x8xf32> to vector<1x8x8xf32>
    %83 = vector.shape_cast %82 : vector<1x8x8xf32> to vector<8x8xf32>
    %84 = vector.extract_strided_slice %77 {offsets = [3, 0, 0], sizes = [1, 8, 8], strides = [1, 1, 1]} : vector<4x8x8xf32> to vector<1x8x8xf32>
    %85 = vector.shape_cast %84 : vector<1x8x8xf32> to vector<8x8xf32>
    %86 = tpu.concatenate %79, %81, %83, %85 in 1 : vector<8x8xf32>, vector<8x8xf32>, vector<8x8xf32>, vector<8x8xf32> -> vector<8x32xf32>
    %87 = arith.truncf %86 : vector<8x32xf32> to vector<8x32xbf16>
    %c0_16 = arith.constant 0 : index
    %c0_17 = arith.constant 0 : index
    %88 = vector.load %arg4[%c0_16, %c0_17] : memref<32x32xbf16, #tpu.memory_space<vmem>>, vector<32x32xbf16>
    %cst_18 = arith.constant dense<0.000000e+00> : vector<8x32xf32>
    %89 = tpu.matmul %87, %88, %cst_18 {dimension_numbers = #tpu.dot_dimension_numbers<[1], [0], [0], [1], [0, 0, 1, 1], [], []>} : vector<8x32xbf16>, vector<32x32xbf16>, vector<8x32xf32> -> vector<8x32xf32>
    %c0_19 = arith.constant 0 : index
    %c0_20 = arith.constant 0 : index
    %90 = vector.load %arg5[%c0_19, %c0_20] : memref<1x32xf32, #tpu.memory_space<vmem>>, vector<1x32xf32>
    %91 = vector.broadcast %90 : vector<1x32xf32> to vector<8x32xf32>
    %92 = arith.addf %89, %91 : vector<8x32xf32>
    %93 = arith.addf %1, %92 : vector<8x32xf32>
    %cst_21 = arith.constant dense<0.000000e+00> : vector<8xf32>
    %94 = vector.multi_reduction <add>, %93, %cst_21 [1] : vector<8x32xf32> to vector<8xf32>
    %95 = vector.shape_cast %94 : vector<8xf32> to vector<8x1xf32>
    %cst_22 = arith.constant 3.200000e+01 : f32
    %96 = vector.broadcast %cst_22 : f32 to vector<8x1xf32>
    %97 = arith.divf %95, %96 : vector<8x1xf32>
    %98 = vector.broadcast %97 : vector<8x1xf32> to vector<8x32xf32>
    %99 = arith.subf %93, %98 : vector<8x32xf32>
    %100 = arith.mulf %99, %99 : vector<8x32xf32>
    %cst_23 = arith.constant dense<0.000000e+00> : vector<8xf32>
    %101 = vector.multi_reduction <add>, %100, %cst_23 [1] : vector<8x32xf32> to vector<8xf32>
    %102 = vector.shape_cast %101 : vector<8xf32> to vector<8x1xf32>
    %cst_24 = arith.constant 3.200000e+01 : f32
    %103 = vector.broadcast %cst_24 : f32 to vector<8x1xf32>
    %104 = arith.divf %102, %103 : vector<8x1xf32>
    %cst_25 = arith.constant 9.99999974E-6 : f32
    %105 = vector.broadcast %cst_25 : f32 to vector<8x1xf32>
    %106 = arith.addf %104, %105 : vector<8x1xf32>
    %107 = math.rsqrt %106 : vector<8x1xf32>
    %108 = vector.broadcast %107 : vector<8x1xf32> to vector<8x32xf32>
    %109 = arith.mulf %99, %108 : vector<8x32xf32>
    %110 = arith.truncf %109 : vector<8x32xf32> to vector<8x32xbf16>
    %c0_26 = arith.constant 0 : index
    %c0_27 = arith.constant 0 : index
    %111 = vector.load %arg6[%c0_26, %c0_27] : memref<32x128xbf16, #tpu.memory_space<vmem>>, vector<32x128xbf16>
    %cst_28 = arith.constant dense<0.000000e+00> : vector<8x128xf32>
    %112 = tpu.matmul %110, %111, %cst_28 {dimension_numbers = #tpu.dot_dimension_numbers<[1], [0], [0], [1], [0, 0, 1, 1], [], []>} : vector<8x32xbf16>, vector<32x128xbf16>, vector<8x128xf32> -> vector<8x128xf32>
    %c0_29 = arith.constant 0 : index
    %c0_30 = arith.constant 0 : index
    %113 = vector.load %arg7[%c0_29, %c0_30] : memref<1x128xf32, #tpu.memory_space<vmem>>, vector<1x128xf32>
    %114 = vector.broadcast %113 : vector<1x128xf32> to vector<8x128xf32>
    %115 = arith.addf %112, %114 : vector<8x128xf32>
    %cst_31 = arith.constant 5.000000e-01 : f32
    %116 = vector.broadcast %cst_31 : f32 to vector<8x128xf32>
    %117 = arith.mulf %116, %115 : vector<8x128xf32>
    %cst_32 = arith.constant 4.471500e-02 : f32
    %118 = vector.broadcast %cst_32 : f32 to vector<8x128xf32>
    %119 = arith.mulf %118, %115 : vector<8x128xf32>
    %120 = arith.mulf %119, %115 : vector<8x128xf32>
    %121 = arith.mulf %120, %115 : vector<8x128xf32>
    %122 = arith.addf %115, %121 : vector<8x128xf32>
    %cst_33 = arith.constant 0.797884583 : f32
    %123 = vector.broadcast %cst_33 : f32 to vector<8x128xf32>
    %124 = arith.mulf %123, %122 : vector<8x128xf32>
    %125 = math.tanh %124 : vector<8x128xf32>
    %cst_34 = arith.constant 1.000000e+00 : f32
    %126 = vector.broadcast %cst_34 : f32 to vector<8x128xf32>
    %127 = arith.addf %126, %125 : vector<8x128xf32>
    %128 = arith.mulf %117, %127 : vector<8x128xf32>
    %129 = arith.truncf %128 : vector<8x128xf32> to vector<8x128xbf16>
    %c0_35 = arith.constant 0 : index
    %c0_36 = arith.constant 0 : index
    %130 = vector.load %arg8[%c0_35, %c0_36] : memref<128x32xbf16, #tpu.memory_space<vmem>>, vector<128x32xbf16>
    %cst_37 = arith.constant dense<0.000000e+00> : vector<8x32xf32>
    %131 = tpu.matmul %129, %130, %cst_37 {dimension_numbers = #tpu.dot_dimension_numbers<[1], [0], [0], [1], [0, 0, 1, 1], [], []>} : vector<8x128xbf16>, vector<128x32xbf16>, vector<8x32xf32> -> vector<8x32xf32>
    %c0_38 = arith.constant 0 : index
    %c0_39 = arith.constant 0 : index
    %132 = vector.load %arg9[%c0_38, %c0_39] : memref<1x32xf32, #tpu.memory_space<vmem>>, vector<1x32xf32>
    %133 = vector.broadcast %132 : vector<1x32xf32> to vector<8x32xf32>
    %134 = arith.addf %131, %133 : vector<8x32xf32>
    %135 = arith.addf %93, %134 : vector<8x32xf32>
    %c0_40 = arith.constant 0 : index
    %c0_41 = arith.constant 0 : index
    %c0_42 = arith.constant 0 : index
    %136 = vector.load %arg10[%c0_40, %c0_41, %c0_42] : memref<1x8x32xf32, #tpu.memory_space<vmem>>, vector<1x8x32xf32>
    %137 = vector.shape_cast %136 : vector<1x8x32xf32> to vector<8x32xf32>
    %138 = vector.shape_cast %135 : vector<8x32xf32> to vector<1x8x32xf32>
    tpu.vector_store %arg10[%c0_40, %c0_41, %c0_42], %138 {strides = array<i32>} : memref<1x8x32xf32, #tpu.memory_space<vmem>>, vector<1x8x32xf32>,
    return
  }
  func.func @transform_0(%arg0: i32) -> (i32, i32, i32) {
    %c0_i32 = arith.constant 0 : i32
    %c0_i32_0 = arith.constant 0 : i32
    %c0_i32_1 = arith.constant 0 : i32
    return %arg0, %c0_i32, %c0_i32_0 : i32, i32, i32
  }
  func.func @transform_1(%arg0: i32) -> (i32, i32) {
    %c0_i32 = arith.constant 0 : i32
    %c0_i32_0 = arith.constant 0 : i32
    %c0_i32_1 = arith.constant 0 : i32
    return %c0_i32, %c0_i32_0 : i32, i32
  }
  func.func @transform_2(%arg0: i32) -> (i32, i32) {
    %c0_i32 = arith.constant 0 : i32
    %c0_i32_0 = arith.constant 0 : i32
    %c0_i32_1 = arith.constant 0 : i32
    return %c0_i32, %c0_i32_0 : i32, i32
  }
  func.func @transform_3(%arg0: i32) -> (i32, i32) {
    %c0_i32 = arith.constant 0 : i32
    %c0_i32_0 = arith.constant 0 : i32
    %c0_i32_1 = arith.constant 0 : i32
    return %c0_i32, %c0_i32_0 : i32, i32
  }
  func.func @transform_4(%arg0: i32) -> (i32, i32) {
    %c0_i32 = arith.constant 0 : i32
    %c0_i32_0 = arith.constant 0 : i32
    %c0_i32_1 = arith.constant 0 : i32
    return %c0_i32, %c0_i32_0 : i32, i32
  }
  func.func @transform_5(%arg0: i32) -> (i32, i32) {
    %c0_i32 = arith.constant 0 : i32
    %c0_i32_0 = arith.constant 0 : i32
    %c0_i32_1 = arith.constant 0 : i32
    return %c0_i32, %c0_i32_0 : i32, i32
  }
  func.func @transform_6(%arg0: i32) -> (i32, i32) {
    %c0_i32 = arith.constant 0 : i32
    %c0_i32_0 = arith.constant 0 : i32
    %c0_i32_1 = arith.constant 0 : i32
    return %c0_i32, %c0_i32_0 : i32, i32
  }
  func.func @transform_7(%arg0: i32) -> (i32, i32) {
    %c0_i32 = arith.constant 0 : i32
    %c0_i32_0 = arith.constant 0 : i32
    %c0_i32_1 = arith.constant 0 : i32
    return %c0_i32, %c0_i32_0 : i32, i32
  }
  func.func @transform_8(%arg0: i32) -> (i32, i32) {
    %c0_i32 = arith.constant 0 : i32
    %c0_i32_0 = arith.constant 0 : i32
    %c0_i32_1 = arith.constant 0 : i32
    return %c0_i32, %c0_i32_0 : i32, i32
  }
  func.func @transform_9(%arg0: i32) -> (i32, i32, i32) {
    %c0_i32 = arith.constant 0 : i32
    %c0_i32_0 = arith.constant 0 : i32
    %c0_i32_1 = arith.constant 0 : i32
    return %arg0, %c0_i32, %c0_i32_0 : i32, i32, i32
  }
}

</mosaic_0001>

<llo_original>
// kernel: tpu_custom_call.1
$region0: #{tpu_custom_call.1}
  #allocation0 [shape = 'u32[]', space=smem, size = 0x4, offset = 0x4, fixed_abs, tag = 'smem constant byte address 0x4 - core index']
  #allocation1 [shape = 'u32[144,128]{1,0:T(1,128)}', space=vmem, size = 0x12000, scoped, tag = 'internal scratch']
  %s0 = inlined_call_operand.hbm [shape: f32[2,8,32], index: 0, kind: input, shape index: {}]
  %s1 = inlined_call_operand.hbm [shape: bf16[32,96], index: 1, kind: input, shape index: {}]
  %s2 = inlined_call_operand.hbm [shape: f32[1,96], index: 2, kind: input, shape index: {}]
  %s3 = inlined_call_operand.hbm [shape: bf16[32,32], index: 3, kind: input, shape index: {}]
  %s4 = inlined_call_operand.hbm [shape: f32[1,32], index: 4, kind: input, shape index: {}]
  %s5 = inlined_call_operand.hbm [shape: bf16[32,128], index: 5, kind: input, shape index: {}]
  %s6 = inlined_call_operand.hbm [shape: f32[1,128], index: 6, kind: input, shape index: {}]
  %s7 = inlined_call_operand.hbm [shape: bf16[128,32], index: 7, kind: input, shape index: {}]
  %s8 = inlined_call_operand.hbm [shape: f32[1,32], index: 8, kind: input, shape index: {}]
  %s9 = inlined_call_operand.hbm [shape: f32[2,8,32], index: 9, kind: output, shape index: {}]
  %s10 = sld [smem:[#allocation0]]
  $region105: #{tpu_custom_call.1} parent=0
    _
  %s12 = ssub.s32 1, %s10
  %s13 = scalar_select 0, %s12, %s10
  $region1: #{tpu_custom_call.1} parent=0
    #allocation2 [shape = 'u8[8192]{0}', space=vmem, size = 0x2000, scoped, tag = 'input window, operand 0']
    #allocation3 [shape = 's32[2]{0}', space=sflag, size = 0x8, scoped, tag = 'scoped memory for tpu_custom_call.1']
    #allocation4 [shape = 's32[2]{0}', space=sflag, size = 0x8, scoped, tag = 'scoped memory for tpu_custom_call.1']
    #allocation5 [shape = 'u8[8192]{0}', space=vmem, size = 0x2000, scoped, tag = 'input window, operand 1, single buffered']
    #allocation6 [shape = 's32[1]{0}', space=sflag, size = 0x4, scoped, tag = 'scoped memory for tpu_custom_call.1']
    #allocation7 [shape = 'u8[512]{0}', space=vmem, size = 0x400, scoped, tag = 'input window, operand 2, single buffered']
    #allocation8 [shape = 'u8[8192]{0}', space=vmem, size = 0x2000, scoped, tag = 'input window, operand 3, single buffered']
    #allocation9 [shape = 's32[1]{0}', space=sflag, size = 0x4, scoped, tag = 'scoped memory for tpu_custom_call.1']
    #allocation10 [shape = 'u8[512]{0}', space=vmem, size = 0x400, scoped, tag = 'input window, operand 4, single buffered']
    #allocation11 [shape = 'u8[8192]{0}', space=vmem, size = 0x2000, scoped, tag = 'input window, operand 5, single buffered']
    #allocation12 [shape = 's32[1]{0}', space=sflag, size = 0x4, scoped, tag = 'scoped memory for tpu_custom_call.1']
    #allocation13 [shape = 'u8[512]{0}', space=vmem, size = 0x400, scoped, tag = 'input window, operand 6, single buffered']
    #allocation14 [shape = 'u8[32768]{0}', space=vmem, size = 0x8000, scoped, tag = 'input window, operand 7, single buffered']
    #allocation15 [shape = 's32[1]{0}', space=sflag, size = 0x4, scoped, tag = 'scoped memory for tpu_custom_call.1']
    #allocation16 [shape = 'u8[512]{0}', space=vmem, size = 0x400, scoped, tag = 'input window, operand 8, single buffered']
    #allocation17 [shape = 'u8[8192]{0}', space=vmem, size = 0x2000, scoped, tag = 'output window, operand 0']
    %14 = vsyncpa [#allocation3], 0
    %s15 = scalar_lea.sflag [#allocation3], 1
    %16 = vsyncpa %s15, 0
    %17 = vsyncpa [#allocation6], 0
    %18 = vsyncpa [#allocation9], 0
    %19 = vsyncpa [#allocation12], 0
    %20 = vsyncpa [#allocation15], 0
    %21 = vsyncpa [#allocation4], 0
    %s22 = scalar_lea.sflag [#allocation4], 1
    %23 = vsyncpa %s22, 0
    loop: start=0, step=1, limit=4
    $region2: #{tpu_custom_call.1} parent=1 // loop_pre_header
      _
    $region3: #{tpu_custom_call.1} parent=1 // loop_header
      %s25 = sphi 0, %s29
      %p26 = scmp.ge.s32.totalorder %s25, 4
      %s35 = sphi 0, %s37
      %s38 = sphi 0, %s35
      %s39 = sphi 0, %s38
      %s55 = sphi 0, %s39
      %s59 = sphi 0, %s59
      %s61 = sphi 0, %s59
      %s62 = sphi 0, %s61
      %s76 = sphi 0, %s62
      %s80 = sphi 0, %s80
      %s82 = sphi 0, %s80
      %s83 = sphi 0, %s82
      %s97 = sphi 0, %s83
      %s101 = sphi 0, %s101
      %s103 = sphi 0, %s101
      %s104 = sphi 0, %s103
      %s118 = sphi 0, %s104
      %s122 = sphi 0, %s122
      %s124 = sphi 0, %s122
      %s125 = sphi 0, %s124
      %s139 = sphi 0, %s125
      %s143 = sphi 0, %s143
      %s145 = sphi 0, %s143
      %s146 = sphi 0, %s145
      %s160 = sphi 0, %s146
      %s164 = sphi 0, %s164
      %s166 = sphi 0, %s164
      %s167 = sphi 0, %s166
      %s181 = sphi 0, %s167
      %s185 = sphi 0, %s185
      %s187 = sphi 0, %s185
      %s188 = sphi 0, %s187
      %s202 = sphi 0, %s188
      %s206 = sphi 0, %s206
      %s208 = sphi 0, %s206
      %s209 = sphi 0, %s208
      %s223 = sphi 0, %s209
      %s229 = sphi 0, %s231
      %s232 = sphi 0, %s229
      %s233 = sphi 0, %s232
      %s249 = sphi 0, %s233
    $region4: #{tpu_custom_call.1} parent=1 // loop_header_branch
      %28 = sbr.rel (%p26) target = $region8
    $region5: #{tpu_custom_call.1} parent=1 // loop_body
      %s30 = ssub.s32 %s25, 1
      %s31 = ssub.s32 %s25, 2
      %s32 = sadd.s32 %s25, 1
      %s33 = ssub.s32 %s25, %s32
      %p34 = scmp.eq.s32.totalorder %s33, 0
      %s36 = sadd.s32 %s35, 1
      %s37 = scalar_select %p34, %s35, %s36
      %p40 = pneg %p34
      %p41 = scmp.eq.s32.totalorder %s25, 1
      %p42 = por %p40, %p41
      %p43 = scmp.ne.s32.totalorder %s35, %s38
      %p44 = scmp.eq.s32.totalorder %s25, 0
      %p45 = por %p43, %p44
      %p46 = scmp.ne.s32.totalorder %s35, %s38
      %p47 = scmp.eq.s32.totalorder %s30, 1
      %p48 = por %p46, %p47
      %p49 = scmp.ne.s32.totalorder %s38, %s39
      %p50 = scmp.eq.s32.totalorder %s30, 0
      %p51 = por %p49, %p50
      %p52 = scmp.ne.s32.totalorder %s38, %s39
      %p53 = scmp.eq.s32.totalorder %s31, 1
      %p54 = por %p52, %p53
      %p56 = scmp.ne.s32.totalorder %s39, %s55
      %p57 = scmp.eq.s32.totalorder %s31, 0
      %p58 = por %p56, %p57
      %s60 = sadd.s32 %s59, 1
      %p63 = scmp.eq.s32.totalorder %s25, 1
      %p64 = scmp.ne.s32.totalorder %s59, %s61
      %p65 = scmp.eq.s32.totalorder %s25, 0
      %p66 = por %p64, %p65
      %p67 = scmp.ne.s32.totalorder %s59, %s61
      %p68 = scmp.eq.s32.totalorder %s30, 1
      %p69 = por %p67, %p68
      %p70 = scmp.ne.s32.totalorder %s61, %s62
      %p71 = scmp.eq.s32.totalorder %s30, 0
      %p72 = por %p70, %p71
      %p73 = scmp.ne.s32.totalorder %s61, %s62
      %p74 = scmp.eq.s32.totalorder %s31, 1
      %p75 = por %p73, %p74
      %p77 = scmp.ne.s32.totalorder %s62, %s76
      %p78 = scmp.eq.s32.totalorder %s31, 0
      %p79 = por %p77, %p78
      %s81 = sadd.s32 %s80, 1
      %p84 = scmp.eq.s32.totalorder %s25, 1
      %p85 = scmp.ne.s32.totalorder %s80, %s82
      %p86 = scmp.eq.s32.totalorder %s25, 0
      %p87 = por %p85, %p86
      %p88 = scmp.ne.s32.totalorder %s80, %s82
      %p89 = scmp.eq.s32.totalorder %s30, 1
      %p90 = por %p88, %p89
      %p91 = scmp.ne.s32.totalorder %s82, %s83
      %p92 = scmp.eq.s32.totalorder %s30, 0
      %p93 = por %p91, %p92
      %p94 = scmp.ne.s32.totalorder %s82, %s83
      %p95 = scmp.eq.s32.totalorder %s31, 1
      %p96 = por %p94, %p95
      %p98 = scmp.ne.s32.totalorder %s83, %s97
      %p99 = scmp.eq.s32.totalorder %s31, 0
      %p100 = por %p98, %p99
      %s102 = sadd.s32 %s101, 1
      %p105 = scmp.eq.s32.totalorder %s25, 1
      %p106 = scmp.ne.s32.totalorder %s101, %s103
      %p107 = scmp.eq.s32.totalorder %s25, 0
      %p108 = por %p106, %p107
      %p109 = scmp.ne.s32.totalorder %s101, %s103
      %p110 = scmp.eq.s32.totalorder %s30, 1
      %p111 = por %p109, %p110
      %p112 = scmp.ne.s32.totalorder %s103, %s104
      %p113 = scmp.eq.s32.totalorder %s30, 0
      %p114 = por %p112, %p113
      %p115 = scmp.ne.s32.totalorder %s103, %s104
      %p116 = scmp.eq.s32.totalorder %s31, 1
      %p117 = por %p115, %p116
      %p119 = scmp.ne.s32.totalorder %s104, %s118
      %p120 = scmp.eq.s32.totalorder %s31, 0
      %p121 = por %p119, %p120
      %s123 = sadd.s32 %s122, 1
      %p126 = scmp.eq.s32.totalorder %s25, 1
      %p127 = scmp.ne.s32.totalorder %s122, %s124
      %p128 = scmp.eq.s32.totalorder %s25, 0
      %p129 = por %p127, %p128
      %p130 = scmp.ne.s32.totalorder %s122, %s124
      %p131 = scmp.eq.s32.totalorder %s30, 1
      %p132 = por %p130, %p131
      %p133 = scmp.ne.s32.totalorder %s124, %s125
      %p134 = scmp.eq.s32.totalorder %s30, 0
      %p135 = por %p133, %p134
      %p136 = scmp.ne.s32.totalorder %s124, %s125
      %p137 = scmp.eq.s32.totalorder %s31, 1
      %p138 = por %p136, %p137
      %p140 = scmp.ne.s32.totalorder %s125, %s139
      %p141 = scmp.eq.s32.totalorder %s31, 0
      %p142 = por %p140, %p141
      %s144 = sadd.s32 %s143, 1
      %p147 = scmp.eq.s32.totalorder %s25, 1
      %p148 = scmp.ne.s32.totalorder %s143, %s145
      %p149 = scmp.eq.s32.totalorder %s25, 0
      %p150 = por %p148, %p149
      %p151 = scmp.ne.s32.totalorder %s143, %s145
      %p152 = scmp.eq.s32.totalorder %s30, 1
      %p153 = por %p151, %p152
      %p154 = scmp.ne.s32.totalorder %s145, %s146
      %p155 = scmp.eq.s32.totalorder %s30, 0
      %p156 = por %p154, %p155
      %p157 = scmp.ne.s32.totalorder %s145, %s146
      %p158 = scmp.eq.s32.totalorder %s31, 1
      %p159 = por %p157, %p158
      %p161 = scmp.ne.s32.totalorder %s146, %s160
      %p162 = scmp.eq.s32.totalorder %s31, 0
      %p163 = por %p161, %p162
      %s165 = sadd.s32 %s164, 1
      %p168 = scmp.eq.s32.totalorder %s25, 1
      %p169 = scmp.ne.s32.totalorder %s164, %s166
      %p170 = scmp.eq.s32.totalorder %s25, 0
      %p171 = por %p169, %p170
      %p172 = scmp.ne.s32.totalorder %s164, %s166
      %p173 = scmp.eq.s32.totalorder %s30, 1
      %p174 = por %p172, %p173
      %p175 = scmp.ne.s32.totalorder %s166, %s167
      %p176 = scmp.eq.s32.totalorder %s30, 0
      %p177 = por %p175, %p176
      %p178 = scmp.ne.s32.totalorder %s166, %s167
      %p179 = scmp.eq.s32.totalorder %s31, 1
      %p180 = por %p178, %p179
      %p182 = scmp.ne.s32.totalorder %s167, %s181
      %p183 = scmp.eq.s32.totalorder %s31, 0
      %p184 = por %p182, %p183
      %s186 = sadd.s32 %s185, 1
      %p189 = scmp.eq.s32.totalorder %s25, 1
      %p190 = scmp.ne.s32.totalorder %s185, %s187
      %p191 = scmp.eq.s32.totalorder %s25, 0
      %p192 = por %p190, %p191
      %p193 = scmp.ne.s32.totalorder %s185, %s187
      %p194 = scmp.eq.s32.totalorder %s30, 1
      %p195 = por %p193, %p194
      %p196 = scmp.ne.s32.totalorder %s187, %s188
      %p197 = scmp.eq.s32.totalorder %s30, 0
      %p198 = por %p196, %p197
      %p199 = scmp.ne.s32.totalorder %s187, %s188
      %p200 = scmp.eq.s32.totalorder %s31, 1
      %p201 = por %p199, %p200
      %p203 = scmp.ne.s32.totalorder %s188, %s202
      %p204 = scmp.eq.s32.totalorder %s31, 0
      %p205 = por %p203, %p204
      %s207 = sadd.s32 %s206, 1
      %p210 = scmp.eq.s32.totalorder %s25, 1
      %p211 = scmp.ne.s32.totalorder %s206, %s208
      %p212 = scmp.eq.s32.totalorder %s25, 0
      %p213 = por %p211, %p212
      %p214 = scmp.ne.s32.totalorder %s206, %s208
      %p215 = scmp.eq.s32.totalorder %s30, 1
      %p216 = por %p214, %p215
      %p217 = scmp.ne.s32.totalorder %s208, %s209
      %p218 = scmp.eq.s32.totalorder %s30, 0
      %p219 = por %p217, %p218
      %p220 = scmp.ne.s32.totalorder %s208, %s209
      %p221 = scmp.eq.s32.totalorder %s31, 1
      %p222 = por %p220, %p221
      %p224 = scmp.ne.s32.totalorder %s209, %s223
      %p225 = scmp.eq.s32.totalorder %s31, 0
      %p226 = por %p224, %p225
      %s227 = ssub.s32 %s25, %s32
      %p228 = scmp.eq.s32.totalorder %s227, 0
      %s230 = sadd.s32 %s229, 1
      %s231 = scalar_select %p228, %s229, %s230
      %p234 = pneg %p228
      %p235 = scmp.eq.s32.totalorder %s25, 1
      %p236 = por %p234, %p235
      %p237 = scmp.ne.s32.totalorder %s229, %s232
      %p238 = scmp.eq.s32.totalorder %s25, 0
      %p239 = por %p237, %p238
      %p240 = scmp.ne.s32.totalorder %s229, %s232
      %p241 = scmp.eq.s32.totalorder %s30, 1
      %p242 = por %p240, %p241
      %p243 = scmp.ne.s32.totalorder %s232, %s233
      %p244 = scmp.eq.s32.totalorder %s30, 0
      %p245 = por %p243, %p244
      %p246 = scmp.ne.s32.totalorder %s232, %s233
      %p247 = scmp.eq.s32.totalorder %s31, 1
      %p248 = por %p246, %p247
      %p250 = scmp.ne.s32.totalorder %s233, %s249
      %p251 = scmp.eq.s32.totalorder %s31, 0
      %p252 = por %p250, %p251
      %p253 = scmp.le.s32.totalorder 1, %s25
      %p254 = scmp.lt.s32.totalorder %s25, 3
      %p255 = pnand %p253, %p254
      %p256 = pneg %p255
      // Predicated region
      $region9: #{tpu_custom_call.1} parent=5 // pred_check
        _
      $region10: #{tpu_custom_call.1} parent=5 // pred_check_branch
        %258 = sbr.rel (%p255) target = $region12
      $region11: #{tpu_custom_call.1} parent=5 // pred_region
        %s259 = ssub.s32 %s25, 1
        // Predicated region
        $region13: #{tpu_custom_call.1} parent=11 // pred_check
          %p260 = pneg %p72
        $region14: #{tpu_custom_call.1} parent=11 // pred_check_branch
          %262 = sbr.rel (%p260) target = $region16
        $region15: #{tpu_custom_call.1} parent=11 // pred_region
          %s264 = ssub.s32 256, 256
          %265 = vsyncadd [#allocation6], %s264
          %s266 = sshll.u32 [#allocation5], 4
          %s267 = int_to_ptr.vmem [resolvable:$true] %s266
          %272 = dma.hbm_to_vmem [thread:$0]  %s1, 256, %s267, [#allocation6], 64, 64, 4
        $region16: #{tpu_custom_call.1} parent=11 // pred_fallthru
          _
        // Predicated region
        $region17: #{tpu_custom_call.1} parent=11 // pred_check
          %p273 = pneg %p93
        $region18: #{tpu_custom_call.1} parent=11 // pred_check_branch
          %275 = sbr.rel (%p273) target = $region20
        $region19: #{tpu_custom_call.1} parent=11 // pred_region
          %s277 = ssub.s32 16, 16
          %278 = vsyncadd [#allocation6], %s277
          %s280 = sshll.u32 [#allocation7], 4
          %s281 = int_to_ptr.vmem [resolvable:$true] %s280
          %283 = dma.hbm_to_vmem [thread:$0]  %s2, 16, %s281, [#allocation6]
        $region20: #{tpu_custom_call.1} parent=11 // pred_fallthru
          _
        // Predicated region
        $region21: #{tpu_custom_call.1} parent=11 // pred_check
          %p284 = pneg %p114
        $region22: #{tpu_custom_call.1} parent=11 // pred_check_branch
          %286 = sbr.rel (%p284) target = $region24
        $region23: #{tpu_custom_call.1} parent=11 // pred_region
          %s288 = ssub.s32 256, 256
          %289 = vsyncadd [#allocation9], %s288
          %s290 = sshll.u32 [#allocation8], 4
          %s291 = int_to_ptr.vmem [resolvable:$true] %s290
          %296 = dma.hbm_to_vmem [thread:$0]  %s3, 256, %s291, [#allocation9], 64, 64, 4
        $region24: #{tpu_custom_call.1} parent=11 // pred_fallthru
          _
        // Predicated region
        $region25: #{tpu_custom_call.1} parent=11 // pred_check
          %p297 = pneg %p135
        $region26: #{tpu_custom_call.1} parent=11 // pred_check_branch
          %299 = sbr.rel (%p297) target = $region28
        $region27: #{tpu_custom_call.1} parent=11 // pred_region
          %s301 = ssub.s32 16, 16
          %302 = vsyncadd [#allocation9], %s301
          %s304 = sshll.u32 [#allocation10], 4
          %s305 = int_to_ptr.vmem [resolvable:$true] %s304
          %307 = dma.hbm_to_vmem [thread:$0]  %s4, 16, %s305, [#allocation9]
        $region28: #{tpu_custom_call.1} parent=11 // pred_fallthru
          _
        // Predicated region
        $region29: #{tpu_custom_call.1} parent=11 // pred_check
          %p308 = pneg %p156
        $region30: #{tpu_custom_call.1} parent=11 // pred_check_branch
          %310 = sbr.rel (%p308) target = $region32
        $region31: #{tpu_custom_call.1} parent=11 // pred_region
          %s312 = ssub.s32 256, 256
          %313 = vsyncadd [#allocation12], %s312
          %s314 = sshll.u32 [#allocation11], 4
          %s315 = int_to_ptr.vmem [resolvable:$true] %s314
          %320 = dma.hbm_to_vmem [thread:$0]  %s5, 256, %s315, [#allocation12], 64, 64, 4
        $region32: #{tpu_custom_call.1} parent=11 // pred_fallthru
          _
        // Predicated region
        $region33: #{tpu_custom_call.1} parent=11 // pred_check
          %p321 = pneg %p177
        $region34: #{tpu_custom_call.1} parent=11 // pred_check_branch
          %323 = sbr.rel (%p321) target = $region36
        $region35: #{tpu_custom_call.1} parent=11 // pred_region
          %s325 = ssub.s32 16, 16
          %326 = vsyncadd [#allocation12], %s325
          %s328 = sshll.u32 [#allocation13], 4
          %s329 = int_to_ptr.vmem [resolvable:$true] %s328
          %331 = dma.hbm_to_vmem [thread:$0]  %s6, 16, %s329, [#allocation12]
        $region36: #{tpu_custom_call.1} parent=11 // pred_fallthru
          _
        // Predicated region
        $region37: #{tpu_custom_call.1} parent=11 // pred_check
          %p332 = pneg %p198
        $region38: #{tpu_custom_call.1} parent=11 // pred_check_branch
          %334 = sbr.rel (%p332) target = $region40
        $region39: #{tpu_custom_call.1} parent=11 // pred_region
          %s336 = ssub.s32 1024, 1024
          %337 = vsyncadd [#allocation15], %s336
          %s338 = sshll.u32 [#allocation14], 4
          %s339 = int_to_ptr.vmem [resolvable:$true] %s338
          %344 = dma.hbm_to_vmem [thread:$0]  %s7, 1024, %s339, [#allocation15], 64, 64, 4
        $region40: #{tpu_custom_call.1} parent=11 // pred_fallthru
          _
        // Predicated region
        $region41: #{tpu_custom_call.1} parent=11 // pred_check
          %p345 = pneg %p219
        $region42: #{tpu_custom_call.1} parent=11 // pred_check_branch
          %347 = sbr.rel (%p345) target = $region44
        $region43: #{tpu_custom_call.1} parent=11 // pred_region
          %s349 = ssub.s32 16, 16
          %350 = vsyncadd [#allocation15], %s349
          %s352 = sshll.u32 [#allocation16], 4
          %s353 = int_to_ptr.vmem [resolvable:$true] %s352
          %355 = dma.hbm_to_vmem [thread:$0]  %s8, 16, %s353, [#allocation15]
        $region44: #{tpu_custom_call.1} parent=11 // pred_fallthru
          _
      $region12: #{tpu_custom_call.1} parent=5 // pred_fallthru
        _
      %p356 = scmp.lt.s32.totalorder %s25, 2
      // Predicated region
      $region45: #{tpu_custom_call.1} parent=5 // pred_check
        %p357 = pneg %p356
      $region46: #{tpu_custom_call.1} parent=5 // pred_check_branch
        %359 = sbr.rel (%p357) target = $region48
      $region47: #{tpu_custom_call.1} parent=5 // pred_region
        // Predicated region
        $region49: #{tpu_custom_call.1} parent=47 // pred_check
          %p360 = pneg %p45
        $region50: #{tpu_custom_call.1} parent=47 // pred_check_branch
          %362 = sbr.rel (%p360) target = $region52
        $region51: #{tpu_custom_call.1} parent=47 // pred_region
          %s363 = sand.u32 %s35, 1
          %s364 = scalar_lea.sflag [#allocation3], %s363
          %s365 = sand.u32 %s35, 1
          %s366 = smul.addr %s365, 8
          %s367 = scalar_lea.vmem [#allocation2], %s366
          %s369 = ssub.s32 128, 128
          %370 = vsyncadd %s364, %s369
          %s371 = smul.addr %s25, 128
          %s372 = scalar_lea.hbm %s0, %s371
          %s374 = sshll.u32 %s367, 4
          %s375 = int_to_ptr.vmem [resolvable:$true] %s374
          %377 = dma.hbm_to_vmem [thread:$0]  %s372, 128, %s375, %s364
        $region52: #{tpu_custom_call.1} parent=47 // pred_fallthru
          _
      $region48: #{tpu_custom_call.1} parent=5 // pred_fallthru
        _
      %p378 = scmp.le.s32.totalorder 1, %s25
      %p379 = scmp.lt.s32.totalorder %s25, 3
      %p380 = pnand %p378, %p379
      %p381 = pneg %p380
      // Predicated region
      $region53: #{tpu_custom_call.1} parent=5 // pred_check
        _
      $region54: #{tpu_custom_call.1} parent=5 // pred_check_branch
        %383 = sbr.rel (%p380) target = $region56
      $region55: #{tpu_custom_call.1} parent=5 // pred_region
        %s384 = ssub.s32 %s25, 1
        %s385 = sand.u32 %s38, 1
        %s386 = scalar_lea.sflag [#allocation3], %s385
        %s387 = sand.u32 %s38, 1
        %s388 = smul.addr %s387, 8
        %s389 = scalar_lea.vmem [#allocation2], %s388
        // Predicated region
        $region57: #{tpu_custom_call.1} parent=55 // pred_check
          %p390 = pneg %p51
        $region58: #{tpu_custom_call.1} parent=55 // pred_check_branch
          %392 = sbr.rel (%p390) target = $region60
        $region59: #{tpu_custom_call.1} parent=55 // pred_region
          %393 = dma.done %s386, 128
        $region60: #{tpu_custom_call.1} parent=55 // pred_fallthru
          _
        // Predicated region
        $region61: #{tpu_custom_call.1} parent=55 // pred_check
          %p394 = pneg %p72
        $region62: #{tpu_custom_call.1} parent=55 // pred_check_branch
          %396 = sbr.rel (%p394) target = $region64
        $region63: #{tpu_custom_call.1} parent=55 // pred_region
          %397 = dma.done [#allocation6], 256
        $region64: #{tpu_custom_call.1} parent=55 // pred_fallthru
          _
        // Predicated region
        $region65: #{tpu_custom_call.1} parent=55 // pred_check
          %p398 = pneg %p93
        $region66: #{tpu_custom_call.1} parent=55 // pred_check_branch
          %400 = sbr.rel (%p398) target = $region68
        $region67: #{tpu_custom_call.1} parent=55 // pred_region
          %401 = dma.done [#allocation6], 16
        $region68: #{tpu_custom_call.1} parent=55 // pred_fallthru
          _
        // Predicated region
        $region69: #{tpu_custom_call.1} parent=55 // pred_check
          %p402 = pneg %p114
        $region70: #{tpu_custom_call.1} parent=55 // pred_check_branch
          %404 = sbr.rel (%p402) target = $region72
        $region71: #{tpu_custom_call.1} parent=55 // pred_region
          %405 = dma.done [#allocation9], 256
        $region72: #{tpu_custom_call.1} parent=55 // pred_fallthru
          _
        // Predicated region
        $region73: #{tpu_custom_call.1} parent=55 // pred_check
          %p406 = pneg %p135
        $region74: #{tpu_custom_call.1} parent=55 // pred_check_branch
          %408 = sbr.rel (%p406) target = $region76
        $region75: #{tpu_custom_call.1} parent=55 // pred_region
          %409 = dma.done [#allocation9], 16
        $region76: #{tpu_custom_call.1} parent=55 // pred_fallthru
          _
        // Predicated region
        $region77: #{tpu_custom_call.1} parent=55 // pred_check
          %p410 = pneg %p156
        $region78: #{tpu_custom_call.1} parent=55 // pred_check_branch
          %412 = sbr.rel (%p410) target = $region80
        $region79: #{tpu_custom_call.1} parent=55 // pred_region
          %413 = dma.done [#allocation12], 256
        $region80: #{tpu_custom_call.1} parent=55 // pred_fallthru
          _
        // Predicated region
        $region81: #{tpu_custom_call.1} parent=55 // pred_check
          %p414 = pneg %p177
        $region82: #{tpu_custom_call.1} parent=55 // pred_check_branch
          %416 = sbr.rel (%p414) target = $region84
        $region83: #{tpu_custom_call.1} parent=55 // pred_region
          %417 = dma.done [#allocation12], 16
        $region84: #{tpu_custom_call.1} parent=55 // pred_fallthru
          _
        // Predicated region
        $region85: #{tpu_custom_call.1} parent=55 // pred_check
          %p418 = pneg %p198
        $region86: #{tpu_custom_call.1} parent=55 // pred_check_branch
          %420 = sbr.rel (%p418) target = $region88
        $region87: #{tpu_custom_call.1} parent=55 // pred_region
          %421 = dma.done [#allocation15], 1024
        $region88: #{tpu_custom_call.1} parent=55 // pred_fallthru
          _
        // Predicated region
        $region89: #{tpu_custom_call.1} parent=55 // pred_check
          %p422 = pneg %p219
        $region90: #{tpu_custom_call.1} parent=55 // pred_check_branch
          %424 = sbr.rel (%p422) target = $region92
        $region91: #{tpu_custom_call.1} parent=55 // pred_region
          %425 = dma.done [#allocation15], 16
        $region92: #{tpu_custom_call.1} parent=55 // pred_fallthru
          _
        %s426 = sand.u32 %s38, 1
        %s427 = scalar_lea.sflag [#allocation3], %s426
        %s428 = sand.u32 %s38, 1
        %s429 = smul.addr %s428, 8
        %s430 = scalar_lea.vmem [#allocation2], %s429
        %p431 = pneg %p51
        %p432 = pneg %p48
        %p433 = pneg %p72
        %p434 = pneg %p69
        %p435 = pneg %p93
        %p436 = pneg %p90
        %p437 = pneg %p114
        %p438 = pneg %p111
        %p439 = pneg %p135
        %p440 = pneg %p132
        %p441 = pneg %p156
        %p442 = pneg %p153
        %p443 = pneg %p177
        %p444 = pneg %p174
        %p445 = pneg %p198
        %p446 = pneg %p195
        %p447 = pneg %p219
        %p448 = pneg %p216
        %p449 = pneg %p245
        %p450 = pneg %p242
        %s451 = sand.u32 %s232, 1
        %s452 = scalar_lea.sflag [#allocation4], %s451
        %s453 = sand.u32 %s232, 1
        %s454 = smul.addr %s453, 8
        %s455 = scalar_lea.vmem [#allocation17], %s454
        %v457 = vld [vmem:[%s389] sm:$0xff]
        %vm458 = vcmask 261120
        %v459 = vsel %vm458, %v457, 0.0
        %460 = vadd.xlane.f32.xlu0 %v459
        %v461 = vpop.xlane.xlu0 %460
        %v462 = vrcp.pop 32.0
        %v463 = vmul.f32 %v461, %v462
        %v464 = vsub.f32 %v457, %v463
        %v465 = vmul.f32 %v464, %v464
        %v466 = vsel %vm458, %v465, 0.0
        %467 = vadd.xlane.f32.xlu0 %v466
        %v468 = vpop.xlane.xlu0 %467
        %v469 = vmul.f32 %v468, %v462
        %v470 = vadd.f32 %v469, 1e-05
        %v471 = vrsqrt.pop %v470
        %v472 = vmul.f32 %v464, %v471
        %v473 = vpack.c.bf16 %v472, %v472
        %v474 = vld [vmem:[#allocation5] sm:$0xf]
        %v475 = vld [vmem:[#allocation5 + $0x4] sm:$0xf]
        %v476 = vld [vmem:[#allocation5 + $0x8] sm:$0xf]
        %v477 = vld [vmem:[#allocation5 + $0xc] sm:$0xf]
        %v478 = vld [vmem:[#allocation7] sm:$0x1]
        %v480 = vlaneseq
        %v481 = vshrl.u32 %v480, 7
        %v482 = vsub.s32 0, %v481
        %v483 = vrot.slane %v478, %v482
        %v489 = vunpack.c.l.b16 %v474
        %v490 = vunpack.c.l.b16 %v475
        %v491 = vunpack.c.l.b16 %v476
        %v492 = vunpack.c.l.b16 %v477
        %v493 = vpack.c.b16 %v490, %v489
        %v494 = vpack.c.b16 %v492, %v491
        %v498 = vsel %vm458, %v473, 0
        %500 = vmatprep.subr.bf16.mxu0 0
        %501 = vmatpush1.bf16.msra.mxu0 %v493
        %502 = vmatprep.subr.bf16.mxu0 0
        %503 = vmatpush1.bf16.msra.mxu0 %v494
        %504 = vmatprep.subr.bf16.mxu0 0
        %505 = vmatpush1.bf16.msra.mxu0 0
        %506 = vmatprep.subr.bf16.mxu0 0
        %507 = vmatpush1.bf16.msra.mxu0 0
        %508 = vmatprep.subr.bf16.mxu0 0
        %509 = vmatpush1.bf16.msra.mxu0 0
        %510 = vmatprep.subr.bf16.mxu0 0
        %511 = vmatpush1.bf16.msra.mxu0 0
        %512 = vmatprep.subr.bf16.mxu0 0
        %513 = vmatpush1.bf16.msra.mxu0 0
        %514 = vmatprep.subr.bf16.mxu0 0
        %515 = vmatpush1.bf16.msra.mxu0 0
        %516 = vmatprep.subr.bf16.mxu0 0
        %517 = vmatpush1.bf16.msra.mxu0 0
        %518 = vmatprep.subr.bf16.mxu0 0
        %519 = vmatpush1.bf16.msra.mxu0 0
        %520 = vmatprep.subr.bf16.mxu0 0
        %521 = vmatpush1.bf16.msra.mxu0 0
        %522 = vmatprep.subr.bf16.mxu0 0
        %523 = vmatpush1.bf16.msra.mxu0 0
        %524 = vmatprep.subr.bf16.mxu0 0
        %525 = vmatpush1.bf16.msra.mxu0 0
        %526 = vmatprep.subr.bf16.mxu0 0
        %527 = vmatpush1.bf16.msra.mxu0 0
        %528 = vmatprep.subr.bf16.mxu0 0
        %529 = vmatpush1.bf16.msra.mxu0 0
        %530 = vmatprep.subr.bf16.mxu0 0
        %531 = vmatpush1.bf16.msra.mxu0 0
        %532 = vmatprep.mubr.bf16.mxu0 0
        %533 = vmatmul.mubr.bf16.gmra.mrb[0].mxu0 %v498
        %v534 = vpop.f32.mrb[0].mxu0
        %v535 = vadd.f32 %v483, %v534
        %v536 = vpop.f32.mrb[0].mxu0
        %v537 = vpop.f32.mrb[0].mxu0
        %v538 = vpop.f32.mrb[0].mxu0
        %539 = vdwg.mxu0
        %541 = vrot.lane.b32.xlu0 %v535, 120
        %v542 = vpop.permute.xlu0 %541
        %544 = vrot.lane.b32.xlu0 %v535, 112
        %v545 = vpop.permute.xlu0 %544
        %547 = vrot.lane.b32.xlu0 %v535, 104
        %v548 = vpop.permute.xlu0 %547
        %v550 = vpack.c.bf16 %v535, %v535
        %v551 = vpack.c.bf16 %v542, %v542
        %v552 = vpack.c.bf16 %v545, %v545
        %v553 = vpack.c.bf16 %v548, %v548
        %555 = vrot.lane.b32.xlu0 %v550, 96
        %v556 = vpop.permute.xlu0 %555
        %vm557 = vcmask 64512
        %v559 = vsel %vm557, %v550, 0
        %v562 = vsel %vm557, %v556, 0
        %564 = vmatprep.subr.bf16.mxu0 0
        %565 = vmatpush1.bf16.xpose.msra.mxu0 %v562
        %566 = vmatprep.subr.bf16.mxu0 0
        %567 = vmatpush1.bf16.xpose.msra.mxu0 0
        %568 = vmatprep.subr.bf16.mxu0 0
        %569 = vmatpush1.bf16.xpose.msra.mxu0 0
        %570 = vmatprep.subr.bf16.mxu0 0
        %571 = vmatpush1.bf16.xpose.msra.mxu0 0
        %572 = vmatprep.subr.bf16.mxu0 0
        %573 = vmatpush1.bf16.xpose.msra.mxu0 0
        %574 = vmatprep.subr.bf16.mxu0 0
        %575 = vmatpush1.bf16.xpose.msra.mxu0 0
        %576 = vmatprep.subr.bf16.mxu0 0
        %577 = vmatpush1.bf16.xpose.msra.mxu0 0
        %578 = vmatprep.subr.bf16.mxu0 0
        %579 = vmatpush1.bf16.xpose.msra.mxu0 0
        %580 = vmatprep.subr.bf16.mxu0 0
        %581 = vmatpush1.bf16.xpose.msra.mxu0 0
        %582 = vmatprep.subr.bf16.mxu0 0
        %583 = vmatpush1.bf16.xpose.msra.mxu0 0
        %584 = vmatprep.subr.bf16.mxu0 0
        %585 = vmatpush1.bf16.xpose.msra.mxu0 0
        %586 = vmatprep.subr.bf16.mxu0 0
        %587 = vmatpush1.bf16.xpose.msra.mxu0 0
        %588 = vmatprep.subr.bf16.mxu0 0
        %589 = vmatpush1.bf16.xpose.msra.mxu0 0
        %590 = vmatprep.subr.bf16.mxu0 0
        %591 = vmatpush1.bf16.xpose.msra.mxu0 0
        %592 = vmatprep.subr.bf16.mxu0 0
        %593 = vmatpush1.bf16.xpose.msra.mxu0 0
        %594 = vmatprep.subr.bf16.mxu0 0
        %595 = vmatpush1.bf16.xpose.msra.mxu0 0
        %596 = vmatprep.mubr.bf16.mxu0 0
        %597 = vmatmul.mubr.bf16.gmra.mrb[0].mxu0 %v559
        %v598 = vpop.f32.mrb[0].mxu0
        %v599 = vadd.f32 0.0, %v598
        %v600 = vpop.f32.mrb[0].mxu0
        %v601 = vpop.f32.mrb[0].mxu0
        %v602 = vpop.f32.mrb[0].mxu0
        %603 = vdwg.mxu0
        %605 = vrot.lane.b32.xlu0 %v551, 96
        %v606 = vpop.permute.xlu0 %605
        %v608 = vsel %vm557, %v551, 0
        %v611 = vsel %vm557, %v606, 0
        %613 = vmatprep.subr.bf16.mxu0 0
        %614 = vmatpush1.bf16.xpose.msra.mxu0 %v611
        %615 = vmatprep.subr.bf16.mxu0 0
        %616 = vmatpush1.bf16.xpose.msra.mxu0 0
        %617 = vmatprep.subr.bf16.mxu0 0
        %618 = vmatpush1.bf16.xpose.msra.mxu0 0
        %619 = vmatprep.subr.bf16.mxu0 0
        %620 = vmatpush1.bf16.xpose.msra.mxu0 0
        %621 = vmatprep.subr.bf16.mxu0 0
        %622 = vmatpush1.bf16.xpose.msra.mxu0 0
        %623 = vmatprep.subr.bf16.mxu0 0
        %624 = vmatpush1.bf16.xpose.msra.mxu0 0
        %625 = vmatprep.subr.bf16.mxu0 0
        %626 = vmatpush1.bf16.xpose.msra.mxu0 0
        %627 = vmatprep.subr.bf16.mxu0 0
        %628 = vmatpush1.bf16.xpose.msra.mxu0 0
        %629 = vmatprep.subr.bf16.mxu0 0
        %630 = vmatpush1.bf16.xpose.msra.mxu0 0
        %631 = vmatprep.subr.bf16.mxu0 0
        %632 = vmatpush1.bf16.xpose.msra.mxu0 0
        %633 = vmatprep.subr.bf16.mxu0 0
        %634 = vmatpush1.bf16.xpose.msra.mxu0 0
        %635 = vmatprep.subr.bf16.mxu0 0
        %636 = vmatpush1.bf16.xpose.msra.mxu0 0
        %637 = vmatprep.subr.bf16.mxu0 0
        %638 = vmatpush1.bf16.xpose.msra.mxu0 0
        %639 = vmatprep.subr.bf16.mxu0 0
        %640 = vmatpush1.bf16.xpose.msra.mxu0 0
        %641 = vmatprep.subr.bf16.mxu0 0
        %642 = vmatpush1.bf16.xpose.msra.mxu0 0
        %643 = vmatprep.subr.bf16.mxu0 0
        %644 = vmatpush1.bf16.xpose.msra.mxu0 0
        %645 = vmatprep.mubr.bf16.mxu0 0
        %646 = vmatmul.mubr.bf16.gmra.mrb[0].mxu0 %v608
        %v647 = vpop.f32.mrb[0].mxu0
        %v648 = vadd.f32 0.0, %v647
        %v649 = vpop.f32.mrb[0].mxu0
        %v650 = vpop.f32.mrb[0].mxu0
        %v651 = vpop.f32.mrb[0].mxu0
        %652 = vdwg.mxu0
        %654 = vrot.lane.b32.xlu0 %v552, 96
        %v655 = vpop.permute.xlu0 %654
        %v657 = vsel %vm557, %v552, 0
        %v660 = vsel %vm557, %v655, 0
        %662 = vmatprep.subr.bf16.mxu0 0
        %663 = vmatpush1.bf16.xpose.msra.mxu0 %v660
        %664 = vmatprep.subr.bf16.mxu0 0
        %665 = vmatpush1.bf16.xpose.msra.mxu0 0
        %666 = vmatprep.subr.bf16.mxu0 0
        %667 = vmatpush1.bf16.xpose.msra.mxu0 0
        %668 = vmatprep.subr.bf16.mxu0 0
        %669 = vmatpush1.bf16.xpose.msra.mxu0 0
        %670 = vmatprep.subr.bf16.mxu0 0
        %671 = vmatpush1.bf16.xpose.msra.mxu0 0
        %672 = vmatprep.subr.bf16.mxu0 0
        %673 = vmatpush1.bf16.xpose.msra.mxu0 0
        %674 = vmatprep.subr.bf16.mxu0 0
        %675 = vmatpush1.bf16.xpose.msra.mxu0 0
        %676 = vmatprep.subr.bf16.mxu0 0
        %677 = vmatpush1.bf16.xpose.msra.mxu0 0
        %678 = vmatprep.subr.bf16.mxu0 0
        %679 = vmatpush1.bf16.xpose.msra.mxu0 0
        %680 = vmatprep.subr.bf16.mxu0 0
        %681 = vmatpush1.bf16.xpose.msra.mxu0 0
        %682 = vmatprep.subr.bf16.mxu0 0
        %683 = vmatpush1.bf16.xpose.msra.mxu0 0
        %684 = vmatprep.subr.bf16.mxu0 0
        %685 = vmatpush1.bf16.xpose.msra.mxu0 0
        %686 = vmatprep.subr.bf16.mxu0 0
        %687 = vmatpush1.bf16.xpose.msra.mxu0 0
        %688 = vmatprep.subr.bf16.mxu0 0
        %689 = vmatpush1.bf16.xpose.msra.mxu0 0
        %690 = vmatprep.subr.bf16.mxu0 0
        %691 = vmatpush1.bf16.xpose.msra.mxu0 0
        %692 = vmatprep.subr.bf16.mxu0 0
        %693 = vmatpush1.bf16.xpose.msra.mxu0 0
        %694 = vmatprep.mubr.bf16.mxu0 0
        %695 = vmatmul.mubr.bf16.gmra.mrb[0].mxu0 %v657
        %v696 = vpop.f32.mrb[0].mxu0
        %v697 = vadd.f32 0.0, %v696
        %v698 = vpop.f32.mrb[0].mxu0
        %v699 = vpop.f32.mrb[0].mxu0
        %v700 = vpop.f32.mrb[0].mxu0
        %701 = vdwg.mxu0
        %703 = vrot.lane.b32.xlu0 %v553, 96
        %v704 = vpop.permute.xlu0 %703
        %v706 = vsel %vm557, %v553, 0
        %v709 = vsel %vm557, %v704, 0
        %711 = vmatprep.subr.bf16.mxu0 0
        %712 = vmatpush1.bf16.xpose.msra.mxu0 %v709
        %713 = vmatprep.subr.bf16.mxu0 0
        %714 = vmatpush1.bf16.xpose.msra.mxu0 0
        %715 = vmatprep.subr.bf16.mxu0 0
        %716 = vmatpush1.bf16.xpose.msra.mxu0 0
        %717 = vmatprep.subr.bf16.mxu0 0
        %718 = vmatpush1.bf16.xpose.msra.mxu0 0
        %719 = vmatprep.subr.bf16.mxu0 0
        %720 = vmatpush1.bf16.xpose.msra.mxu0 0
        %721 = vmatprep.subr.bf16.mxu0 0
        %722 = vmatpush1.bf16.xpose.msra.mxu0 0
        %723 = vmatprep.subr.bf16.mxu0 0
        %724 = vmatpush1.bf16.xpose.msra.mxu0 0
        %725 = vmatprep.subr.bf16.mxu0 0
        %726 = vmatpush1.bf16.xpose.msra.mxu0 0
        %727 = vmatprep.subr.bf16.mxu0 0
        %728 = vmatpush1.bf16.xpose.msra.mxu0 0
        %729 = vmatprep.subr.bf16.mxu0 0
        %730 = vmatpush1.bf16.xpose.msra.mxu0 0
        %731 = vmatprep.subr.bf16.mxu0 0
        %732 = vmatpush1.bf16.xpose.msra.mxu0 0
        %733 = vmatprep.subr.bf16.mxu0 0
        %734 = vmatpush1.bf16.xpose.msra.mxu0 0
        %735 = vmatprep.subr.bf16.mxu0 0
        %736 = vmatpush1.bf16.xpose.msra.mxu0 0
        %737 = vmatprep.subr.bf16.mxu0 0
        %738 = vmatpush1.bf16.xpose.msra.mxu0 0
        %739 = vmatprep.subr.bf16.mxu0 0
        %740 = vmatpush1.bf16.xpose.msra.mxu0 0
        %741 = vmatprep.subr.bf16.mxu0 0
        %742 = vmatpush1.bf16.xpose.msra.mxu0 0
        %743 = vmatprep.mubr.bf16.mxu0 0
        %744 = vmatmul.mubr.bf16.gmra.mrb[0].mxu0 %v706
        %v745 = vpop.f32.mrb[0].mxu0
        %v746 = vadd.f32 0.0, %v745
        %v747 = vpop.f32.mrb[0].mxu0
        %v748 = vpop.f32.mrb[0].mxu0
        %v749 = vpop.f32.mrb[0].mxu0
        %750 = vdwg.mxu0
        %v751 = vlaneseq
        %v752 = vshrl.u32 %v751, 7
        %v753 = vlaneseq
        %v754 = vand.u32 %v753, 127
        %vm755 = vcmp.ge.s32.totalorder %v752, %v754
        %v756 = vsel %vm755, 1, 0
        %vm757 = vcmp.eq.s32.totalorder %v756, 1
        %v758 = vsel %vm757, %v599, -1e+30
        %v759 = vsel %vm757, %v648, -1e+30
        %v760 = vsel %vm757, %v697, -1e+30
        %v761 = vsel %vm757, %v746, -1e+30
        %v762 = vsel %vm557, %v758, -inf
        %763 = vmax.xlane.f32.xlu0 %v762
        %v764 = vpop.xlane.xlu0 %763
        %v765 = vsel %vm557, %v759, -inf
        %766 = vmax.xlane.f32.xlu0 %v765
        %v767 = vpop.xlane.xlu0 %766
        %v768 = vsel %vm557, %v760, -inf
        %769 = vmax.xlane.f32.xlu0 %v768
        %v770 = vpop.xlane.xlu0 %769
        %v771 = vsel %vm557, %v761, -inf
        %772 = vmax.xlane.f32.xlu0 %v771
        %v773 = vpop.xlane.xlu0 %772
        %v774 = vsub.f32 %v758, %v764
        %v775 = vsub.f32 %v759, %v767
        %v776 = vsub.f32 %v760, %v770
        %v777 = vsub.f32 %v761, %v773
        %v778 = vmul.f32 %v774, 1.442695
        %v779 = vpow.pop %v778
        %v780 = vmul.f32 %v775, 1.442695
        %v781 = vpow.pop %v780
        %v782 = vmul.f32 %v776, 1.442695
        %v783 = vpow.pop %v782
        %v784 = vmul.f32 %v777, 1.442695
        %v785 = vpow.pop %v784
        %v786 = vsel %vm557, %v779, 0.0
        %787 = vadd.xlane.f32.xlu0 %v786
        %v788 = vpop.xlane.xlu0 %787
        %v789 = vsel %vm557, %v781, 0.0
        %790 = vadd.xlane.f32.xlu0 %v789
        %v791 = vpop.xlane.xlu0 %790
        %v792 = vsel %vm557, %v783, 0.0
        %793 = vadd.xlane.f32.xlu0 %v792
        %v794 = vpop.xlane.xlu0 %793
        %v795 = vsel %vm557, %v785, 0.0
        %796 = vadd.xlane.f32.xlu0 %v795
        %v797 = vpop.xlane.xlu0 %796
        %v798 = vrcp.pop %v788
        %v799 = vrcp.pop %v791
        %v800 = vrcp.pop %v794
        %v801 = vrcp.pop %v797
        %v802 = vmul.f32 %v779, %v798
        %v803 = vmul.f32 %v781, %v799
        %v804 = vmul.f32 %v783, %v800
        %v805 = vmul.f32 %v785, %v801
        %v806 = vpack.c.bf16 %v802, %v802
        %v807 = vpack.c.bf16 %v803, %v803
        %v808 = vpack.c.bf16 %v804, %v804
        %v809 = vpack.c.bf16 %v805, %v805
        %810 = vrot.lane.b32.xlu0 %v550, 64
        %v811 = vpop.permute.xlu0 %810
        %v813 = vsel %vm557, %v806, 0
        %vm815 = vcmask 1043456
        %v817 = vsel %vm815, %v811, 0
        %819 = vmatprep.subr.bf16.mxu0 0
        %820 = vmatpush1.bf16.msra.mxu0 %v817
        %821 = vmatprep.subr.bf16.mxu0 0
        %822 = vmatpush1.bf16.msra.mxu0 0
        %823 = vmatprep.subr.bf16.mxu0 0
        %824 = vmatpush1.bf16.msra.mxu0 0
        %825 = vmatprep.subr.bf16.mxu0 0
        %826 = vmatpush1.bf16.msra.mxu0 0
        %827 = vmatprep.subr.bf16.mxu0 0
        %828 = vmatpush1.bf16.msra.mxu0 0
        %829 = vmatprep.subr.bf16.mxu0 0
        %830 = vmatpush1.bf16.msra.mxu0 0
        %831 = vmatprep.subr.bf16.mxu0 0
        %832 = vmatpush1.bf16.msra.mxu0 0
        %833 = vmatprep.subr.bf16.mxu0 0
        %834 = vmatpush1.bf16.msra.mxu0 0
        %835 = vmatprep.subr.bf16.mxu0 0
        %836 = vmatpush1.bf16.msra.mxu0 0
        %837 = vmatprep.subr.bf16.mxu0 0
        %838 = vmatpush1.bf16.msra.mxu0 0
        %839 = vmatprep.subr.bf16.mxu0 0
        %840 = vmatpush1.bf16.msra.mxu0 0
        %841 = vmatprep.subr.bf16.mxu0 0
        %842 = vmatpush1.bf16.msra.mxu0 0
        %843 = vmatprep.subr.bf16.mxu0 0
        %844 = vmatpush1.bf16.msra.mxu0 0
        %845 = vmatprep.subr.bf16.mxu0 0
        %846 = vmatpush1.bf16.msra.mxu0 0
        %847 = vmatprep.subr.bf16.mxu0 0
        %848 = vmatpush1.bf16.msra.mxu0 0
        %849 = vmatprep.subr.bf16.mxu0 0
        %850 = vmatpush1.bf16.msra.mxu0 0
        %851 = vmatprep.mubr.bf16.mxu0 0
        %852 = vmatmul.mubr.bf16.gmra.mrb[0].mxu0 %v813
        %v853 = vpop.f32.mrb[0].mxu0
        %v854 = vadd.f32 0.0, %v853
        %v855 = vpop.f32.mrb[0].mxu0
        %v856 = vpop.f32.mrb[0].mxu0
        %v857 = vpop.f32.mrb[0].mxu0
        %858 = vdwg.mxu0
        %859 = vrot.lane.b32.xlu0 %v551, 64
        %v860 = vpop.permute.xlu0 %859
        %v862 = vsel %vm557, %v807, 0
        %v865 = vsel %vm815, %v860, 0
        %867 = vmatprep.subr.bf16.mxu0 0
        %868 = vmatpush1.bf16.msra.mxu0 %v865
        %869 = vmatprep.subr.bf16.mxu0 0
        %870 = vmatpush1.bf16.msra.mxu0 0
        %871 = vmatprep.subr.bf16.mxu0 0
        %872 = vmatpush1.bf16.msra.mxu0 0
        %873 = vmatprep.subr.bf16.mxu0 0
        %874 = vmatpush1.bf16.msra.mxu0 0
        %875 = vmatprep.subr.bf16.mxu0 0
        %876 = vmatpush1.bf16.msra.mxu0 0
        %877 = vmatprep.subr.bf16.mxu0 0
        %878 = vmatpush1.bf16.msra.mxu0 0
        %879 = vmatprep.subr.bf16.mxu0 0
        %880 = vmatpush1.bf16.msra.mxu0 0
        %881 = vmatprep.subr.bf16.mxu0 0
        %882 = vmatpush1.bf16.msra.mxu0 0
        %883 = vmatprep.subr.bf16.mxu0 0
        %884 = vmatpush1.bf16.msra.mxu0 0
        %885 = vmatprep.subr.bf16.mxu0 0
        %886 = vmatpush1.bf16.msra.mxu0 0
        %887 = vmatprep.subr.bf16.mxu0 0
        %888 = vmatpush1.bf16.msra.mxu0 0
        %889 = vmatprep.subr.bf16.mxu0 0
        %890 = vmatpush1.bf16.msra.mxu0 0
        %891 = vmatprep.subr.bf16.mxu0 0
        %892 = vmatpush1.bf16.msra.mxu0 0
        %893 = vmatprep.subr.bf16.mxu0 0
        %894 = vmatpush1.bf16.msra.mxu0 0
        %895 = vmatprep.subr.bf16.mxu0 0
        %896 = vmatpush1.bf16.msra.mxu0 0
        %897 = vmatprep.subr.bf16.mxu0 0
        %898 = vmatpush1.bf16.msra.mxu0 0
        %899 = vmatprep.mubr.bf16.mxu0 0
        %900 = vmatmul.mubr.bf16.gmra.mrb[0].mxu0 %v862
        %v901 = vpop.f32.mrb[0].mxu0
        %v902 = vadd.f32 0.0, %v901
        %v903 = vpop.f32.mrb[0].mxu0
        %v904 = vpop.f32.mrb[0].mxu0
        %v905 = vpop.f32.mrb[0].mxu0
        %906 = vdwg.mxu0
        %907 = vrot.lane.b32.xlu0 %v552, 64
        %v908 = vpop.permute.xlu0 %907
        %v910 = vsel %vm557, %v808, 0
        %v913 = vsel %vm815, %v908, 0
        %915 = vmatprep.subr.bf16.mxu0 0
        %916 = vmatpush1.bf16.msra.mxu0 %v913
        %917 = vmatprep.subr.bf16.mxu0 0
        %918 = vmatpush1.bf16.msra.mxu0 0
        %919 = vmatprep.subr.bf16.mxu0 0
        %920 = vmatpush1.bf16.msra.mxu0 0
        %921 = vmatprep.subr.bf16.mxu0 0
        %922 = vmatpush1.bf16.msra.mxu0 0
        %923 = vmatprep.subr.bf16.mxu0 0
        %924 = vmatpush1.bf16.msra.mxu0 0
        %925 = vmatprep.subr.bf16.mxu0 0
        %926 = vmatpush1.bf16.msra.mxu0 0
        %927 = vmatprep.subr.bf16.mxu0 0
        %928 = vmatpush1.bf16.msra.mxu0 0
        %929 = vmatprep.subr.bf16.mxu0 0
        %930 = vmatpush1.bf16.msra.mxu0 0
        %931 = vmatprep.subr.bf16.mxu0 0
        %932 = vmatpush1.bf16.msra.mxu0 0
        %933 = vmatprep.subr.bf16.mxu0 0
        %934 = vmatpush1.bf16.msra.mxu0 0
        %935 = vmatprep.subr.bf16.mxu0 0
        %936 = vmatpush1.bf16.msra.mxu0 0
        %937 = vmatprep.subr.bf16.mxu0 0
        %938 = vmatpush1.bf16.msra.mxu0 0
        %939 = vmatprep.subr.bf16.mxu0 0
        %940 = vmatpush1.bf16.msra.mxu0 0
        %941 = vmatprep.subr.bf16.mxu0 0
        %942 = vmatpush1.bf16.msra.mxu0 0
        %943 = vmatprep.subr.bf16.mxu0 0
        %944 = vmatpush1.bf16.msra.mxu0 0
        %945 = vmatprep.subr.bf16.mxu0 0
        %946 = vmatpush1.bf16.msra.mxu0 0
        %947 = vmatprep.mubr.bf16.mxu0 0
        %948 = vmatmul.mubr.bf16.gmra.mrb[0].mxu0 %v910
        %v949 = vpop.f32.mrb[0].mxu0
        %v950 = vadd.f32 0.0, %v949
        %v951 = vpop.f32.mrb[0].mxu0
        %v952 = vpop.f32.mrb[0].mxu0
        %v953 = vpop.f32.mrb[0].mxu0
        %954 = vdwg.mxu0
        %955 = vrot.lane.b32.xlu0 %v553, 64
        %v956 = vpop.permute.xlu0 %955
        %v958 = vsel %vm557, %v809, 0
        %v961 = vsel %vm815, %v956, 0
        %963 = vmatprep.subr.bf16.mxu0 0
        %964 = vmatpush1.bf16.msra.mxu0 %v961
        %965 = vmatprep.subr.bf16.mxu0 0
        %966 = vmatpush1.bf16.msra.mxu0 0
        %967 = vmatprep.subr.bf16.mxu0 0
        %968 = vmatpush1.bf16.msra.mxu0 0
        %969 = vmatprep.subr.bf16.mxu0 0
        %970 = vmatpush1.bf16.msra.mxu0 0
        %971 = vmatprep.subr.bf16.mxu0 0
        %972 = vmatpush1.bf16.msra.mxu0 0
        %973 = vmatprep.subr.bf16.mxu0 0
        %974 = vmatpush1.bf16.msra.mxu0 0
        %975 = vmatprep.subr.bf16.mxu0 0
        %976 = vmatpush1.bf16.msra.mxu0 0
        %977 = vmatprep.subr.bf16.mxu0 0
        %978 = vmatpush1.bf16.msra.mxu0 0
        %979 = vmatprep.subr.bf16.mxu0 0
        %980 = vmatpush1.bf16.msra.mxu0 0
        %981 = vmatprep.subr.bf16.mxu0 0
        %982 = vmatpush1.bf16.msra.mxu0 0
        %983 = vmatprep.subr.bf16.mxu0 0
        %984 = vmatpush1.bf16.msra.mxu0 0
        %985 = vmatprep.subr.bf16.mxu0 0
        %986 = vmatpush1.bf16.msra.mxu0 0
        %987 = vmatprep.subr.bf16.mxu0 0
        %988 = vmatpush1.bf16.msra.mxu0 0
        %989 = vmatprep.subr.bf16.mxu0 0
        %990 = vmatpush1.bf16.msra.mxu0 0
        %991 = vmatprep.subr.bf16.mxu0 0
        %992 = vmatpush1.bf16.msra.mxu0 0
        %993 = vmatprep.subr.bf16.mxu0 0
        %994 = vmatpush1.bf16.msra.mxu0 0
        %995 = vmatprep.mubr.bf16.mxu0 0
        %996 = vmatmul.mubr.bf16.gmra.mrb[0].mxu0 %v958
        %v997 = vpop.f32.mrb[0].mxu0
        %v998 = vadd.f32 0.0, %v997
        %v999 = vpop.f32.mrb[0].mxu0
        %v1000 = vpop.f32.mrb[0].mxu0
        %v1001 = vpop.f32.mrb[0].mxu0
        %1002 = vdwg.mxu0
        %1004 = vrot.lane.b32.xlu0 %v902, 8
        %v1005 = vpop.permute.xlu0 %1004
        %1008 = vrot.lane.b32.xlu0 %v950, 16
        %v1009 = vpop.permute.xlu0 %1008
        %1012 = vrot.lane.b32.xlu0 %v998, 24
        %v1013 = vpop.permute.xlu0 %1012
        %v1015 = vsel %vm557, %v854, %v1005
        %vm1016 = vcmask 130048
        %v1017 = vsel %vm1016, %v1015, %v1009
        %vm1018 = vcmask 195584
        %v1019 = vsel %vm1018, %v1017, %v1013
        %v1020 = vpack.c.bf16 %v1019, %v1019
        %v1021 = vld [vmem:[#allocation8] sm:$0xf]
        %v1022 = vld [vmem:[#allocation8 + $0x4] sm:$0xf]
        %v1023 = vld [vmem:[#allocation8 + $0x8] sm:$0xf]
        %v1024 = vld [vmem:[#allocation8 + $0xc] sm:$0xf]
        %v1025 = vld [vmem:[#allocation10] sm:$0x1]
        %v1027 = vlaneseq
        %v1028 = vshrl.u32 %v1027, 7
        %v1029 = vsub.s32 0, %v1028
        %v1030 = vrot.slane %v1025, %v1029
        %v1036 = vunpack.c.l.b16 %v1021
        %v1037 = vunpack.c.l.b16 %v1022
        %v1038 = vunpack.c.l.b16 %v1023
        %v1039 = vunpack.c.l.b16 %v1024
        %v1040 = vpack.c.b16 %v1037, %v1036
        %v1041 = vpack.c.b16 %v1039, %v1038
        %v1045 = vsel %vm458, %v1020, 0
        %1047 = vmatprep.subr.bf16.mxu0 0
        %1048 = vmatpush1.bf16.msra.mxu0 %v1040
        %1049 = vmatprep.subr.bf16.mxu0 0
        %1050 = vmatpush1.bf16.msra.mxu0 %v1041
        %1051 = vmatprep.subr.bf16.mxu0 0
        %1052 = vmatpush1.bf16.msra.mxu0 0
        %1053 = vmatprep.subr.bf16.mxu0 0
        %1054 = vmatpush1.bf16.msra.mxu0 0
        %1055 = vmatprep.subr.bf16.mxu0 0
        %1056 = vmatpush1.bf16.msra.mxu0 0
        %1057 = vmatprep.subr.bf16.mxu0 0
        %1058 = vmatpush1.bf16.msra.mxu0 0
        %1059 = vmatprep.subr.bf16.mxu0 0
        %1060 = vmatpush1.bf16.msra.mxu0 0
        %1061 = vmatprep.subr.bf16.mxu0 0
        %1062 = vmatpush1.bf16.msra.mxu0 0
        %1063 = vmatprep.subr.bf16.mxu0 0
        %1064 = vmatpush1.bf16.msra.mxu0 0
        %1065 = vmatprep.subr.bf16.mxu0 0
        %1066 = vmatpush1.bf16.msra.mxu0 0
        %1067 = vmatprep.subr.bf16.mxu0 0
        %1068 = vmatpush1.bf16.msra.mxu0 0
        %1069 = vmatprep.subr.bf16.mxu0 0
        %1070 = vmatpush1.bf16.msra.mxu0 0
        %1071 = vmatprep.subr.bf16.mxu0 0
        %1072 = vmatpush1.bf16.msra.mxu0 0
        %1073 = vmatprep.subr.bf16.mxu0 0
        %1074 = vmatpush1.bf16.msra.mxu0 0
        %1075 = vmatprep.subr.bf16.mxu0 0
        %1076 = vmatpush1.bf16.msra.mxu0 0
        %1077 = vmatprep.subr.bf16.mxu0 0
        %1078 = vmatpush1.bf16.msra.mxu0 0
        %1079 = vmatprep.mubr.bf16.mxu0 0
        %1080 = vmatmul.mubr.bf16.gmra.mrb[0].mxu0 %v1045
        %v1081 = vpop.f32.mrb[0].mxu0
        %v1082 = vadd.f32 %v1030, %v1081
        %v1083 = vpop.f32.mrb[0].mxu0
        %v1084 = vpop.f32.mrb[0].mxu0
        %v1085 = vpop.f32.mrb[0].mxu0
        %1086 = vdwg.mxu0
        %v1087 = vadd.f32 %v457, %v1082
        %v1088 = vsel %vm458, %v1087, 0.0
        %1089 = vadd.xlane.f32.xlu0 %v1088
        %v1090 = vpop.xlane.xlu0 %1089
        %v1091 = vmul.f32 %v1090, %v462
        %v1092 = vsub.f32 %v1087, %v1091
        %v1093 = vmul.f32 %v1092, %v1092
        %v1094 = vsel %vm458, %v1093, 0.0
        %1095 = vadd.xlane.f32.xlu0 %v1094
        %v1096 = vpop.xlane.xlu0 %1095
        %v1097 = vmul.f32 %v1096, %v462
        %v1098 = vadd.f32 %v1097, 1e-05
        %v1099 = vrsqrt.pop %v1098
        %v1100 = vmul.f32 %v1092, %v1099
        %v1101 = vpack.c.bf16 %v1100, %v1100
        %v1102 = vld [vmem:[#allocation11] sm:$0xf]
        %v1103 = vld [vmem:[#allocation11 + $0x4] sm:$0xf]
        %v1104 = vld [vmem:[#allocation11 + $0x8] sm:$0xf]
        %v1105 = vld [vmem:[#allocation11 + $0xc] sm:$0xf]
        %v1106 = vld [vmem:[#allocation13] sm:$0x1]
        %v1108 = vlaneseq
        %v1109 = vshrl.u32 %v1108, 7
        %v1110 = vsub.s32 0, %v1109
        %v1111 = vrot.slane %v1106, %v1110
        %v1117 = vunpack.c.l.b16 %v1102
        %v1118 = vunpack.c.l.b16 %v1103
        %v1119 = vunpack.c.l.b16 %v1104
        %v1120 = vunpack.c.l.b16 %v1105
        %v1121 = vpack.c.b16 %v1118, %v1117
        %v1122 = vpack.c.b16 %v1120, %v1119
        %v1126 = vsel %vm458, %v1101, 0
        %1128 = vmatprep.subr.bf16.mxu0 0
        %1129 = vmatpush1.bf16.msra.mxu0 %v1121
        %1130 = vmatprep.subr.bf16.mxu0 0
        %1131 = vmatpush1.bf16.msra.mxu0 %v1122
        %1132 = vmatprep.subr.bf16.mxu0 0
        %1133 = vmatpush1.bf16.msra.mxu0 0
        %1134 = vmatprep.subr.bf16.mxu0 0
        %1135 = vmatpush1.bf16.msra.mxu0 0
        %1136 = vmatprep.subr.bf16.mxu0 0
        %1137 = vmatpush1.bf16.msra.mxu0 0
        %1138 = vmatprep.subr.bf16.mxu0 0
        %1139 = vmatpush1.bf16.msra.mxu0 0
        %1140 = vmatprep.subr.bf16.mxu0 0
        %1141 = vmatpush1.bf16.msra.mxu0 0
        %1142 = vmatprep.subr.bf16.mxu0 0
        %1143 = vmatpush1.bf16.msra.mxu0 0
        %1144 = vmatprep.subr.bf16.mxu0 0
        %1145 = vmatpush1.bf16.msra.mxu0 0
        %1146 = vmatprep.subr.bf16.mxu0 0
        %1147 = vmatpush1.bf16.msra.mxu0 0
        %1148 = vmatprep.subr.bf16.mxu0 0
        %1149 = vmatpush1.bf16.msra.mxu0 0
        %1150 = vmatprep.subr.bf16.mxu0 0
        %1151 = vmatpush1.bf16.msra.mxu0 0
        %1152 = vmatprep.subr.bf16.mxu0 0
        %1153 = vmatpush1.bf16.msra.mxu0 0
        %1154 = vmatprep.subr.bf16.mxu0 0
        %1155 = vmatpush1.bf16.msra.mxu0 0
        %1156 = vmatprep.subr.bf16.mxu0 0
        %1157 = vmatpush1.bf16.msra.mxu0 0
        %1158 = vmatprep.subr.bf16.mxu0 0
        %1159 = vmatpush1.bf16.msra.mxu0 0
        %1160 = vmatprep.mubr.bf16.mxu0 0
        %1161 = vmatmul.mubr.bf16.gmra.mrb[0].mxu0 %v1126
        %v1162 = vpop.f32.mrb[0].mxu0
        %v1163 = vadd.f32 %v1111, %v1162
        %v1164 = vpop.f32.mrb[0].mxu0
        %v1165 = vpop.f32.mrb[0].mxu0
        %v1166 = vpop.f32.mrb[0].mxu0
        %1167 = vdwg.mxu0
        %v1168 = vmul.f32 %v1163, 0.5
        %v1169 = vmul.f32 %v1163, 0.044715
        %v1170 = vmul.f32 %v1169, %v1163
        %v1171 = vmul.f32 %v1170, %v1163
        %v1172 = vadd.f32 %v1163, %v1171
        %v1173 = vmul.f32 %v1172, 0.7978846
        %v1174 = vtanh.pop %v1173
        %v1175 = vadd.f32 %v1174, 1.0
        %v1176 = vmul.f32 %v1168, %v1175
        %v1177 = vpack.c.bf16 %v1176, %v1176
        %v1178 = vld [vmem:[#allocation14] sm:$0xf]
        %v1179 = vld [vmem:[#allocation14 + $0x4] sm:$0xf]
        %v1180 = vld [vmem:[#allocation14 + $0x8] sm:$0xf]
        %v1181 = vld [vmem:[#allocation14 + $0xc] sm:$0xf]
        %v1182 = vld [vmem:[#allocation14 + $0x10] sm:$0xf]
        %v1183 = vld [vmem:[#allocation14 + $0x14] sm:$0xf]
        %v1184 = vld [vmem:[#allocation14 + $0x18] sm:$0xf]
        %v1185 = vld [vmem:[#allocation14 + $0x1c] sm:$0xf]
        %v1186 = vld [vmem:[#allocation14 + $0x20] sm:$0xf]
        %v1187 = vld [vmem:[#allocation14 + $0x24] sm:$0xf]
        %v1188 = vld [vmem:[#allocation14 + $0x28] sm:$0xf]
        %v1189 = vld [vmem:[#allocation14 + $0x2c] sm:$0xf]
        %v1190 = vld [vmem:[#allocation14 + $0x30] sm:$0xf]
        %v1191 = vld [vmem:[#allocation14 + $0x34] sm:$0xf]
        %v1192 = vld [vmem:[#allocation14 + $0x38] sm:$0xf]
        %v1193 = vld [vmem:[#allocation14 + $0x3c] sm:$0xf]
        %v1194 = vld [vmem:[#allocation16] sm:$0x1]
        %v1196 = vlaneseq
        %v1197 = vshrl.u32 %v1196, 7
        %v1198 = vsub.s32 0, %v1197
        %v1199 = vrot.slane %v1194, %v1198
        %v1217 = vunpack.c.l.b16 %v1178
        %v1218 = vunpack.c.l.b16 %v1179
        %v1219 = vunpack.c.l.b16 %v1180
        %v1220 = vunpack.c.l.b16 %v1181
        %v1221 = vunpack.c.l.b16 %v1182
        %v1222 = vunpack.c.l.b16 %v1183
        %v1223 = vunpack.c.l.b16 %v1184
        %v1224 = vunpack.c.l.b16 %v1185
        %v1225 = vunpack.c.l.b16 %v1186
        %v1226 = vunpack.c.l.b16 %v1187
        %v1227 = vunpack.c.l.b16 %v1188
        %v1228 = vunpack.c.l.b16 %v1189
        %v1229 = vunpack.c.l.b16 %v1190
        %v1230 = vunpack.c.l.b16 %v1191
        %v1231 = vunpack.c.l.b16 %v1192
        %v1232 = vunpack.c.l.b16 %v1193
        %v1233 = vpack.c.b16 %v1218, %v1217
        %v1234 = vpack.c.b16 %v1220, %v1219
        %v1235 = vpack.c.b16 %v1222, %v1221
        %v1236 = vpack.c.b16 %v1224, %v1223
        %v1237 = vpack.c.b16 %v1226, %v1225
        %v1238 = vpack.c.b16 %v1228, %v1227
        %v1239 = vpack.c.b16 %v1230, %v1229
        %v1240 = vpack.c.b16 %v1232, %v1231
        %1249 = vmatprep.subr.bf16.mxu0 0
        %1250 = vmatpush1.bf16.msra.mxu0 %v1233
        %1251 = vmatprep.subr.bf16.mxu0 0
        %1252 = vmatpush1.bf16.msra.mxu0 %v1234
        %1253 = vmatprep.subr.bf16.mxu0 0
        %1254 = vmatpush1.bf16.msra.mxu0 %v1235
        %1255 = vmatprep.subr.bf16.mxu0 0
        %1256 = vmatpush1.bf16.msra.mxu0 %v1236
        %1257 = vmatprep.subr.bf16.mxu0 0
        %1258 = vmatpush1.bf16.msra.mxu0 %v1237
        %1259 = vmatprep.subr.bf16.mxu0 0
        %1260 = vmatpush1.bf16.msra.mxu0 %v1238
        %1261 = vmatprep.subr.bf16.mxu0 0
        %1262 = vmatpush1.bf16.msra.mxu0 %v1239
        %1263 = vmatprep.subr.bf16.mxu0 0
        %1264 = vmatpush1.bf16.msra.mxu0 %v1240
        %1265 = vmatprep.subr.bf16.mxu0 0
        %1266 = vmatpush1.bf16.msra.mxu0 0
        %1267 = vmatprep.subr.bf16.mxu0 0
        %1268 = vmatpush1.bf16.msra.mxu0 0
        %1269 = vmatprep.subr.bf16.mxu0 0
        %1270 = vmatpush1.bf16.msra.mxu0 0
        %1271 = vmatprep.subr.bf16.mxu0 0
        %1272 = vmatpush1.bf16.msra.mxu0 0
        %1273 = vmatprep.subr.bf16.mxu0 0
        %1274 = vmatpush1.bf16.msra.mxu0 0
        %1275 = vmatprep.subr.bf16.mxu0 0
        %1276 = vmatpush1.bf16.msra.mxu0 0
        %1277 = vmatprep.subr.bf16.mxu0 0
        %1278 = vmatpush1.bf16.msra.mxu0 0
        %1279 = vmatprep.subr.bf16.mxu0 0
        %1280 = vmatpush1.bf16.msra.mxu0 0
        %1281 = vmatprep.mubr.bf16.mxu0 0
        %1282 = vmatmul.mubr.bf16.gmra.mrb[0].mxu0 %v1177
        %v1283 = vpop.f32.mrb[0].mxu0
        %v1284 = vadd.f32 %v1199, %v1283
        %v1285 = vpop.f32.mrb[0].mxu0
        %v1286 = vpop.f32.mrb[0].mxu0
        %v1287 = vpop.f32.mrb[0].mxu0
        %1288 = vdwg.mxu0
        %v1289 = vadd.f32 %v1087, %v1284
        %1290 = vst.msk [vmem:[%s455] sm:$0xff] %vm458, %v1289
        %s1291 = sand.u32 %s232, 1
        %s1292 = scalar_lea.sflag [#allocation4], %s1291
        %s1293 = sand.u32 %s232, 1
        %s1294 = smul.addr %s1293, 8
        %s1295 = scalar_lea.vmem [#allocation17], %s1294
        // Predicated region
        $region93: #{tpu_custom_call.1} parent=55 // pred_check
          %p1296 = pneg %p242
        $region94: #{tpu_custom_call.1} parent=55 // pred_check_branch
          %1298 = sbr.rel (%p1296) target = $region96
        $region95: #{tpu_custom_call.1} parent=55 // pred_region
          %s1300 = ssub.s32 128, 128
          %1301 = vsyncadd %s1292, %s1300
          %s1302 = smul.addr %s30, 128
          %s1303 = scalar_lea.hbm %s9, %s1302
          %s1305 = sshll.u32 %s1295, 4
          %s1306 = int_to_ptr.vmem [resolvable:$true] %s1305
          %1308 = dma.vmem_to_hbm [thread:$0]  %s1306, 128, %s1303, %s1292
        $region96: #{tpu_custom_call.1} parent=55 // pred_fallthru
          _
      $region56: #{tpu_custom_call.1} parent=5 // pred_fallthru
        _
      %p1309 = scmp.le.s32.totalorder 2, %s25
      // Predicated region
      $region97: #{tpu_custom_call.1} parent=5 // pred_check
        %p1310 = pneg %p1309
      $region98: #{tpu_custom_call.1} parent=5 // pred_check_branch
        %1312 = sbr.rel (%p1310) target = $region100
      $region99: #{tpu_custom_call.1} parent=5 // pred_region
        %s1313 = ssub.s32 %s25, 2
        // Predicated region
        $region101: #{tpu_custom_call.1} parent=99 // pred_check
          %p1314 = pneg %p248
        $region102: #{tpu_custom_call.1} parent=99 // pred_check_branch
          %1316 = sbr.rel (%p1314) target = $region104
        $region103: #{tpu_custom_call.1} parent=99 // pred_region
          %s1317 = sand.u32 %s233, 1
          %s1318 = scalar_lea.sflag [#allocation4], %s1317
          %s1319 = sand.u32 %s233, 1
          %s1320 = smul.addr %s1319, 8
          %s1321 = scalar_lea.vmem [#allocation17], %s1320
          %1322 = dma.done %s1318, 128
        $region104: #{tpu_custom_call.1} parent=99 // pred_fallthru
          _
      $region100: #{tpu_custom_call.1} parent=5 // pred_fallthru
        _
    $region6: #{tpu_custom_call.1} parent=1 // loop_footer
      %s29 = sadd.s32 1, %s25
    $region7: #{tpu_custom_call.1} parent=1 // loop_footer_branch
      %24 = sbr.rel target = $region3
    $region8: #{tpu_custom_call.1} parent=1 // loop_exit
      _
    %1323 = vsyncpa [#allocation3], 1
    %s1324 = scalar_lea.sflag [#allocation3], 1
    %1325 = vsyncpa %s1324, 1
    %1326 = vsyncpa [#allocation6], 1
    %1327 = vsyncpa [#allocation9], 1
    %1328 = vsyncpa [#allocation12], 1
    %1329 = vsyncpa [#allocation15], 1
    %1330 = vsyncpa [#allocation4], 1
    %s1331 = scalar_lea.sflag [#allocation4], 1
    %1332 = vsyncpa %s1331, 1

</llo_original>
